<compile_context>
chip_gen: v6e
topology: v6e:2x2x1
jax: 0.10.0
libtpu: 0.0.40
codegen_flags: <defaults>
</compile_context>

<pallas_src>
import functools

import jax
import jax.numpy as jnp
import numpy as np
from jax.experimental import pallas as pl
from jax.experimental.pallas import tpu as pltpu

# ----------------------------- model sizes ---------------------------------
B, V, E, H = 2, 32, 32, 32          # batch, vocab, embedding, hidden
LI, LD, LR, LS, LT = 6, 6, 8, 8, 8  # I_word / D_word / ref_tgt / src / tgt len
M = LS + LR                          # attention memory = [src ; template]
USE_EV = True
INV_SQRT_H = 1.0 / float(np.sqrt(H))
NEG_INF = -1e30


# ----------------------------- fused Pallas kernel ---------------------------
def fused_kernel(ref_tpl_ref, ctx_in_ref, ref_res_ref, blank_ref,
                 src_ref, tgt_ref, valid_ref, maskadd_ref,
                 w_ref_ref, w_id_ref, w_ev_ref,
                 w_esrc_ref, w_etpl_ref, w_evin_ref,
                 w_dec_ref, w_out_ref,
                 dec_out_ref, attn_ref, preds_ref, ev_ref,
                 *, use_ev):
    f32 = jnp.float32

    # ---- template generator --------------------------------------------
    h_ref = jnp.tanh(jnp.dot(ref_tpl_ref[...], w_ref_ref[...],
                             preferred_element_type=f32))               # (B*LR, H)
    ctx = jnp.tanh(jnp.dot(ctx_in_ref[...], w_id_ref[...],
                           preferred_element_type=f32))                 # (B, H)
    h_ref3 = h_ref.reshape(B, LR, H)
    scores_t = jnp.sum(ctx[:, None, :] * h_ref3, axis=-1) * INV_SQRT_H  # (B, LR)
    preds = jax.nn.sigmoid(scores_t)
    preds_ref[...] = preds
    ev = jnp.tanh(jnp.dot(ctx, w_ev_ref[...], preferred_element_type=f32))  # (B, H)
    ev_ref[...] = ev
    # ev.detach() in the PyTorch module only affects backward; forward-only here.

    # ---- do_mask_and_clean + re-embedding of the masked template ---------
    # emb_res[where(keep, ids, 0)] == where(keep, emb_res[ids], emb_res[0]);
    # both gathers are precomputed in the wrapper, so no in-kernel gather.
    keep = (preds > 0.5) & (valid_ref[...] > 0.5)                        # (B, LR)
    tpl_emb = jnp.where(keep[:, :, None],
                        ref_res_ref[...].reshape(B, LR, E),
                        blank_ref[...][None, :, :])                      # (B, LR, E)

    # ---- response encoder: memory = [enc(src)+ev_proj ; enc(template)] ----
    src_h = jnp.dot(src_ref[...], w_esrc_ref[...],
                    preferred_element_type=f32).reshape(B, LS, H)
    if use_ev:
        ev_proj = jnp.dot(ev, w_evin_ref[...], preferred_element_type=f32)
        src_h = src_h + ev_proj[:, None, :]
    tpl_h = jnp.dot(tpl_emb.reshape(B * LR, E), w_etpl_ref[...],
                    preferred_element_type=f32).reshape(B, LR, H)
    memory = jnp.concatenate([jnp.tanh(src_h), jnp.tanh(tpl_h)], axis=1)  # (B, M, H)

    # ---- response decoder with dot-product attention over the memory -----
    dec_h = jnp.tanh(jnp.dot(tgt_ref[...], w_dec_ref[...],
                             preferred_element_type=f32)).reshape(B, LT, H)
    scores = jnp.einsum('bth,bmh->btm', dec_h * INV_SQRT_H, memory,
                        preferred_element_type=f32)                      # (B, LT, M)
    scores = scores + maskadd_ref[...][:, None, :]                       # additive mask
    mx = jnp.max(scores, axis=-1, keepdims=True)
    ex = jnp.exp(scores - mx)
    denom = jnp.sum(ex, axis=-1, keepdims=True)
    attn = ex * pl.reciprocal(denom, approx=True)
    attn_ref[...] = attn
    cx = jnp.einsum('btm,bmh->bth', attn, memory, preferred_element_type=f32)
    dc = jnp.concatenate([dec_h, cx], axis=-1).reshape(B * LT, 2 * H)
    dec_out_ref[...] = jnp.tanh(
        jnp.dot(dc, w_out_ref[...], preferred_element_type=f32)).reshape(B, LT, H)


# ----------------------------- JAX glue --------------------------------------
def masked_mean(x, lengths):
    """x: (B, L, E), lengths: (B,) -> (B, E) length-masked mean pooling."""
    L = x.shape[1]
    mask = (jnp.arange(L)[None, :] < lengths[:, None]).astype(x.dtype)
    s = jnp.sum(x * mask[:, :, None], axis=1)
    return s / jnp.maximum(lengths.astype(x.dtype), 1.0)[:, None]


@functools.partial(jax.jit, static_argnames=('use_ev',))
def fused_forward(params, I_word, I_word_length, D_word, D_word_length,
                  ref_tgt_inputs, ref_tgt_lengths, src_inputs, tgt_inputs,
                  src_lengths, use_ev=USE_EV):
    """Runs the whole pipeline in one Pallas kernel. Returns extra internals
    (preds, ev) for testing; the module forward discards them."""
    embt = params['emb_tpl']
    embr = params['emb_res']

    # Embedding gathers, masks and weight packing stay in XLA; everything else
    # lives in VMEM inside the single fused kernel.
    ref_tpl = embt[ref_tgt_inputs].reshape(B * LR, E)
    ctx_in = jnp.concatenate([masked_mean(embt[I_word], I_word_length),
                              masked_mean(embt[D_word], D_word_length)],
                             axis=-1)                                    # (B, 2E)
    ref_res = embr[ref_tgt_inputs].reshape(B * LR, E)
    blank = embr[0:1]                                                    # <blank> row
    src_emb = embr[src_inputs].reshape(B * LS, E)
    tgt_emb = embr[tgt_inputs].reshape(B * LT, E)

    valid = (jnp.arange(LR)[None, :] < ref_tgt_lengths[:, None]).astype(jnp.float32)
    src_mask = jnp.arange(LS)[None, :] < src_lengths[:, None]
    tpl_mask = jnp.arange(LR)[None, :] < ref_tgt_lengths[:, None]   # template_lengths == ref_tgt_lengths
    mask_add = jnp.where(jnp.concatenate([src_mask, tpl_mask], axis=1),
                         0.0, NEG_INF).astype(jnp.float32)               # (B, M)

    w_id = jnp.concatenate([params['W_I'], params['W_D']], axis=0)            # (2E, H)
    w_out = jnp.concatenate([params['W_out_dec'], params['W_out_ctx']], axis=0)  # (2H, H)

    dec_outputs, attn, preds, ev = pl.pallas_call(
        functools.partial(fused_kernel, use_ev=use_ev),
        out_shape=(jax.ShapeDtypeStruct((B, LT, H), jnp.float32),
                   jax.ShapeDtypeStruct((B, LT, M), jnp.float32),
                   jax.ShapeDtypeStruct((B, LR), jnp.float32),
                   jax.ShapeDtypeStruct((B, H), jnp.float32)),
        compiler_params=pltpu.CompilerParams(vmem_limit_bytes=4 * 1024 * 1024),
        cost_estimate=pl.CostEstimate(flops=260_000, transcendentals=3_000,
                                      bytes_accessed=64 * 1024),
    )(ref_tpl, ctx_in, ref_res, blank, src_emb, tgt_emb, valid, mask_add,
      params['W_ref'], w_id, params['W_ev'],
      params['W_enc_src'], params['W_enc_tpl'], params['W_ev_in'],
      params['W_dec'], w_out)
    return dec_outputs, attn, preds, ev


def tem_res_nmt_forward(params, I_word, I_word_length, D_word, D_word_length,
                        ref_tgt_inputs, ref_tgt_lengths,
                        src_inputs, tgt_inputs, src_lengths, use_ev=USE_EV):
    """Equivalent of tem_resNMTModel.forward -> (dec_outputs, attn)."""
    dec_outputs, attn, _, _ = fused_forward(
        params, I_word, I_word_length, D_word, D_word_length,
        ref_tgt_inputs, ref_tgt_lengths, src_inputs, tgt_inputs, src_lengths,
        use_ev=use_ev)
    return dec_outputs, attn
    # TODO(synk): save_checkpoint/load_checkpoint are torch I/O only — omitted.


# ----------------------------- pure-JAX reference ----------------------------
def reference_forward(params, I_word, I_word_length, D_word, D_word_length,
                      ref_tgt_inputs, ref_tgt_lengths, src_inputs, tgt_inputs,
                      src_lengths, use_ev, keep_override=None):
    embt, embr = params['emb_tpl'], params['emb_res']
    i_ctx = masked_mean(embt[I_word], I_word_length)
    d_ctx = masked_mean(embt[D_word], D_word_length)
    h_ref = jnp.tanh(embt[ref_tgt_inputs] @ params['W_ref'])
    ctx = jnp.tanh(i_ctx @ params['W_I'] + d_ctx @ params['W_D'])
    preds = jax.nn.sigmoid(
        jnp.einsum('bh,blh->bl', ctx, h_ref) / jnp.sqrt(jnp.float32(H)))
    ev = jnp.tanh(ctx @ params['W_ev'])

    valid = jnp.arange(LR)[None, :] < ref_tgt_lengths[:, None]
    keep = keep_override if keep_override is not None else ((preds > 0.5) & valid)
    template_inputs = jnp.where(keep, ref_tgt_inputs, 0)

    src_h = embr[src_inputs] @ params['W_enc_src']
    if use_ev:
        src_h = src_h + (ev @ params['W_ev_in'])[:, None, :]
    memory = jnp.concatenate(
        [jnp.tanh(src_h),
         jnp.tanh(embr[template_inputs] @ params['W_enc_tpl'])], axis=1)
    dec_h = jnp.tanh(embr[tgt_inputs] @ params['W_dec'])
    scores = jnp.einsum('bth,bmh->btm', dec_h, memory) / jnp.sqrt(jnp.float32(H))
    src_mask = jnp.arange(LS)[None, :] < src_lengths[:, None]
    tpl_mask = jnp.arange(LR)[None, :] < ref_tgt_lengths[:, None]
    mem_mask = jnp.concatenate([src_mask, tpl_mask], axis=1)
    scores = jnp.where(mem_mask[:, None, :], scores, NEG_INF)
    attn = jax.nn.softmax(scores, axis=-1)
    cx = jnp.einsum('btm,bmh->bth', attn, memory)
    dec_outputs = jnp.tanh(dec_h @ params['W_out_dec'] + cx @ params['W_out_ctx'])
    return dec_outputs, attn, preds, ev


# ----------------------------- main -------------------------------------------
if __name__ == "__main__":
    key = jax.random.PRNGKey(0)
    ks = jax.random.split(key, 20)

    def w(k, shape, scale=0.1):
        return scale * jax.random.normal(k, shape, dtype=jnp.float32)

    params = {
        'emb_tpl':   w(ks[0], (V, E)),
        'W_ref':     w(ks[1], (E, H)),
        'W_I':       w(ks[2], (E, H)),
        'W_D':       w(ks[3], (E, H)),
        'W_ev':      w(ks[4], (H, H)),
        'emb_res':   w(ks[5], (V, E)),
        'W_enc_src': w(ks[6], (E, H)),
        'W_enc_tpl': w(ks[7], (E, H)),
        'W_ev_in':   w(ks[8], (H, H)),
        'W_dec':     w(ks[9], (E, H)),
        'W_out_dec': w(ks[10], (H, H)),
        'W_out_ctx': w(ks[11], (H, H)),
    }

    I_word = jax.random.randint(ks[12], (B, LI), 1, V, dtype=jnp.int32)
    D_word = jax.random.randint(ks[13], (B, LD), 1, V, dtype=jnp.int32)
    ref_tgt_inputs = jax.random.randint(ks[14], (B, LR), 1, V, dtype=jnp.int32)
    src_inputs = jax.random.randint(ks[15], (B, LS), 1, V, dtype=jnp.int32)
    tgt_inputs = jax.random.randint(ks[16], (B, LT), 1, V, dtype=jnp.int32)
    I_word_length = jnp.array([LI, LI - 2], jnp.int32)
    D_word_length = jnp.array([LD, LD - 1], jnp.int32)
    ref_tgt_lengths = jnp.array([LR, LR - 3], jnp.int32)
    src_lengths = jnp.array([LS, LS - 2], jnp.int32)

    # end-to-end forward (mirrors tem_resNMTModel.forward)
    dec_outputs, attn = tem_res_nmt_forward(
        params, I_word, I_word_length, D_word, D_word_length,
        ref_tgt_inputs, ref_tgt_lengths, src_inputs, tgt_inputs, src_lengths)
    jax.block_until_ready((dec_outputs, attn))

    # numerical check against a pure-JAX reference.  The template keep-mask is
    # derived from the *kernel* preds for both paths so a token exactly at the
    # 0.5 threshold cannot make the comparison flaky.
    dec_k, attn_k, preds_k, ev_k = fused_forward(
        params, I_word, I_word_length, D_word, D_word_length,
        ref_tgt_inputs, ref_tgt_lengths, src_inputs, tgt_inputs, src_lengths)
    valid_np = (jnp.arange(LR)[None, :] < ref_tgt_lengths[:, None])
    keep_k = (preds_k > 0.5) & valid_np
    dec_r, attn_r, preds_r, ev_r = reference_forward(
        params, I_word, I_word_length, D_word, D_word_length,
        ref_tgt_inputs, ref_tgt_lengths, src_inputs, tgt_inputs, src_lengths,
        USE_EV, keep_override=keep_k)

    # template outputs are pure f32 — tight tolerance
    np.testing.assert_allclose(np.asarray(preds_k), np.asarray(preds_r),
                               rtol=2e-5, atol=2e-5)
    np.testing.assert_allclose(np.asarray(ev_k), np.asarray(ev_r),
                               rtol=2e-5, atol=2e-5)
    # decoder outputs use pl.reciprocal(approx=True) in the softmax — relax
    np.testing.assert_allclose(np.asarray(attn_k), np.asarray(attn_r),
                               rtol=1e-2, atol=1e-2)
    np.testing.assert_allclose(np.asarray(dec_k), np.asarray(dec_r),
                               rtol=1e-2, atol=1e-2)

    print("KERNEL_OK")
</pallas_src>

<mosaic_0001>
module attributes {stable_mosaic.version = 11 : i64} {
  func.func @fused_kernel(%arg0: memref<16x32xf32, #tpu.memory_space<vmem>>, %arg1: memref<2x64xf32, #tpu.memory_space<vmem>>, %arg2: memref<16x32xf32, #tpu.memory_space<vmem>>, %arg3: memref<1x32xf32, #tpu.memory_space<vmem>>, %arg4: memref<16x32xf32, #tpu.memory_space<vmem>>, %arg5: memref<16x32xf32, #tpu.memory_space<vmem>>, %arg6: memref<2x8xf32, #tpu.memory_space<vmem>>, %arg7: memref<2x16xf32, #tpu.memory_space<vmem>>, %arg8: memref<32x32xf32, #tpu.memory_space<vmem>>, %arg9: memref<64x32xf32, #tpu.memory_space<vmem>>, %arg10: memref<32x32xf32, #tpu.memory_space<vmem>>, %arg11: memref<32x32xf32, #tpu.memory_space<vmem>>, %arg12: memref<32x32xf32, #tpu.memory_space<vmem>>, %arg13: memref<32x32xf32, #tpu.memory_space<vmem>>, %arg14: memref<32x32xf32, #tpu.memory_space<vmem>>, %arg15: memref<64x32xf32, #tpu.memory_space<vmem>>, %arg16: memref<2x8x32xf32, #tpu.memory_space<vmem>>, %arg17: memref<2x8x16xf32, #tpu.memory_space<vmem>>, %arg18: memref<2x8xf32, #tpu.memory_space<vmem>>, %arg19: memref<2x32xf32, #tpu.memory_space<vmem>>) attributes {dimension_semantics = [], scalar_prefetch = 0 : i64, scratch_operands = 0 : i64, tpu.core_type = #tpu.core_type<tc>} {
    %c0 = arith.constant 0 : index
    %c0_0 = arith.constant 0 : index
    %0 = vector.load %arg0[%c0, %c0_0] : memref<16x32xf32, #tpu.memory_space<vmem>>, vector<16x32xf32>
    %c0_1 = arith.constant 0 : index
    %c0_2 = arith.constant 0 : index
    %1 = vector.load %arg8[%c0_1, %c0_2] : memref<32x32xf32, #tpu.memory_space<vmem>>, vector<32x32xf32>
    %cst = arith.constant dense<0.000000e+00> : vector<16x32xf32>
    %2 = tpu.matmul %0, %1, %cst {dimension_numbers = #tpu.dot_dimension_numbers<[1], [0], [0], [1], [0, 0, 1, 1], [], []>} : vector<16x32xf32>, vector<32x32xf32>, vector<16x32xf32> -> vector<16x32xf32>
    %3 = math.tanh %2 : vector<16x32xf32>
    %c0_3 = arith.constant 0 : index
    %c0_4 = arith.constant 0 : index
    %4 = vector.load %arg1[%c0_3, %c0_4] : memref<2x64xf32, #tpu.memory_space<vmem>>, vector<2x64xf32>
    %c0_5 = arith.constant 0 : index
    %c0_6 = arith.constant 0 : index
    %5 = vector.load %arg9[%c0_5, %c0_6] : memref<64x32xf32, #tpu.memory_space<vmem>>, vector<64x32xf32>
    %cst_7 = arith.constant dense<0.000000e+00> : vector<2x32xf32>
    %6 = tpu.matmul %4, %5, %cst_7 {dimension_numbers = #tpu.dot_dimension_numbers<[1], [0], [0], [1], [0, 0, 1, 1], [], []>} : vector<2x64xf32>, vector<64x32xf32>, vector<2x32xf32> -> vector<2x32xf32>
    %7 = math.tanh %6 : vector<2x32xf32>
    %8 = vector.shape_cast %3 : vector<16x32xf32> to vector<2x8x32xf32>
    %9 = vector.shape_cast %7 : vector<2x32xf32> to vector<2x1x32xf32>
    %10 = vector.broadcast %9 : vector<2x1x32xf32> to vector<2x8x32xf32>
    %11 = arith.mulf %10, %8 : vector<2x8x32xf32>
    %cst_8 = arith.constant dense<0.000000e+00> : vector<2x8xf32>
    %12 = vector.multi_reduction <add>, %11, %cst_8 [2] : vector<2x8x32xf32> to vector<2x8xf32>
    %cst_9 = arith.constant 0.176776692 : f32
    %13 = vector.broadcast %cst_9 : f32 to vector<2x8xf32>
    %14 = arith.mulf %12, %13 : vector<2x8xf32>
    %15 = arith.negf %14 : vector<2x8xf32>
    %16 = math.exp %15 : vector<2x8xf32>
    %cst_10 = arith.constant 1.000000e+00 : f32
    %17 = vector.broadcast %cst_10 : f32 to vector<2x8xf32>
    %18 = arith.addf %17, %16 : vector<2x8xf32>
    %19 = arith.divf %17, %18 : vector<2x8xf32>
    %c0_11 = arith.constant 0 : index
    %c0_12 = arith.constant 0 : index
    %20 = vector.load %arg18[%c0_11, %c0_12] : memref<2x8xf32, #tpu.memory_space<vmem>>, vector<2x8xf32>
    tpu.vector_store %arg18[%c0_11, %c0_12], %19 {strides = array<i32>} : memref<2x8xf32, #tpu.memory_space<vmem>>, vector<2x8xf32>,
    %c0_13 = arith.constant 0 : index
    %c0_14 = arith.constant 0 : index
    %21 = vector.load %arg10[%c0_13, %c0_14] : memref<32x32xf32, #tpu.memory_space<vmem>>, vector<32x32xf32>
    %cst_15 = arith.constant dense<0.000000e+00> : vector<2x32xf32>
    %22 = tpu.matmul %7, %21, %cst_15 {dimension_numbers = #tpu.dot_dimension_numbers<[1], [0], [0], [1], [0, 0, 1, 1], [], []>} : vector<2x32xf32>, vector<32x32xf32>, vector<2x32xf32> -> vector<2x32xf32>
    %23 = math.tanh %22 : vector<2x32xf32>
    %c0_16 = arith.constant 0 : index
    %c0_17 = arith.constant 0 : index
    %24 = vector.load %arg19[%c0_16, %c0_17] : memref<2x32xf32, #tpu.memory_space<vmem>>, vector<2x32xf32>
    tpu.vector_store %arg19[%c0_16, %c0_17], %23 {strides = array<i32>} : memref<2x32xf32, #tpu.memory_space<vmem>>, vector<2x32xf32>,
    %cst_18 = arith.constant 5.000000e-01 : f32
    %25 = vector.broadcast %cst_18 : f32 to vector<2x8xf32>
    %26 = arith.cmpf ogt, %19, %25 : vector<2x8xf32>
    %c0_19 = arith.constant 0 : index
    %c0_20 = arith.constant 0 : index
    %27 = vector.load %arg6[%c0_19, %c0_20] : memref<2x8xf32, #tpu.memory_space<vmem>>, vector<2x8xf32>
    %cst_21 = arith.constant 5.000000e-01 : f32
    %28 = vector.broadcast %cst_21 : f32 to vector<2x8xf32>
    %29 = arith.cmpf ogt, %27, %28 : vector<2x8xf32>
    %30 = arith.andi %26, %29 : vector<2x8xi1>
    %31 = vector.shape_cast %30 : vector<2x8xi1> to vector<2x8x1xi1>
    %c0_22 = arith.constant 0 : index
    %c0_23 = arith.constant 0 : index
    %32 = vector.load %arg2[%c0_22, %c0_23] : memref<16x32xf32, #tpu.memory_space<vmem>>, vector<16x32xf32>
    %33 = vector.shape_cast %32 : vector<16x32xf32> to vector<2x8x32xf32>
    %c0_24 = arith.constant 0 : index
    %c0_25 = arith.constant 0 : index
    %34 = vector.load %arg3[%c0_24, %c0_25] : memref<1x32xf32, #tpu.memory_space<vmem>>, vector<1x32xf32>
    %35 = vector.shape_cast %34 : vector<1x32xf32> to vector<1x1x32xf32>
    %36 = vector.shape_cast %31 : vector<2x8x1xi1> to vector<2x8x1xi1>
    %37 = vector.broadcast %36 : vector<2x8x1xi1> to vector<2x8x32xi1>
    %38 = vector.shape_cast %35 : vector<1x1x32xf32> to vector<1x1x32xf32>
    %39 = vector.broadcast %38 : vector<1x1x32xf32> to vector<2x8x32xf32>
    %40 = arith.select %37, %33, %39 : vector<2x8x32xi1>, vector<2x8x32xf32>
    %c0_26 = arith.constant 0 : index
    %c0_27 = arith.constant 0 : index
    %41 = vector.load %arg4[%c0_26, %c0_27] : memref<16x32xf32, #tpu.memory_space<vmem>>, vector<16x32xf32>
    %c0_28 = arith.constant 0 : index
    %c0_29 = arith.constant 0 : index
    %42 = vector.load %arg11[%c0_28, %c0_29] : memref<32x32xf32, #tpu.memory_space<vmem>>, vector<32x32xf32>
    %cst_30 = arith.constant dense<0.000000e+00> : vector<16x32xf32>
    %43 = tpu.matmul %41, %42, %cst_30 {dimension_numbers = #tpu.dot_dimension_numbers<[1], [0], [0], [1], [0, 0, 1, 1], [], []>} : vector<16x32xf32>, vector<32x32xf32>, vector<16x32xf32> -> vector<16x32xf32>
    %44 = vector.shape_cast %43 : vector<16x32xf32> to vector<2x8x32xf32>
    %c0_31 = arith.constant 0 : index
    %c0_32 = arith.constant 0 : index
    %45 = vector.load %arg13[%c0_31, %c0_32] : memref<32x32xf32, #tpu.memory_space<vmem>>, vector<32x32xf32>
    %cst_33 = arith.constant dense<0.000000e+00> : vector<2x32xf32>
    %46 = tpu.matmul %23, %45, %cst_33 {dimension_numbers = #tpu.dot_dimension_numbers<[1], [0], [0], [1], [0, 0, 1, 1], [], []>} : vector<2x32xf32>, vector<32x32xf32>, vector<2x32xf32> -> vector<2x32xf32>
    %47 = vector.shape_cast %46 : vector<2x32xf32> to vector<2x1x32xf32>
    %48 = vector.broadcast %47 : vector<2x1x32xf32> to vector<2x8x32xf32>
    %49 = arith.addf %44, %48 : vector<2x8x32xf32>
    %50 = vector.shape_cast %40 : vector<2x8x32xf32> to vector<16x32xf32>
    %c0_34 = arith.constant 0 : index
    %c0_35 = arith.constant 0 : index
    %51 = vector.load %arg12[%c0_34, %c0_35] : memref<32x32xf32, #tpu.memory_space<vmem>>, vector<32x32xf32>
    %cst_36 = arith.constant dense<0.000000e+00> : vector<16x32xf32>
    %52 = tpu.matmul %50, %51, %cst_36 {dimension_numbers = #tpu.dot_dimension_numbers<[1], [0], [0], [1], [0, 0, 1, 1], [], []>} : vector<16x32xf32>, vector<32x32xf32>, vector<16x32xf32> -> vector<16x32xf32>
    %53 = vector.shape_cast %52 : vector<16x32xf32> to vector<2x8x32xf32>
    %54 = math.tanh %49 : vector<2x8x32xf32>
    %55 = math.tanh %53 : vector<2x8x32xf32>
    %56 = tpu.concatenate %54, %55 in 1 : vector<2x8x32xf32>, vector<2x8x32xf32> -> vector<2x16x32xf32>
    %c0_37 = arith.constant 0 : index
    %c0_38 = arith.constant 0 : index
    %57 = vector.load %arg5[%c0_37, %c0_38] : memref<16x32xf32, #tpu.memory_space<vmem>>, vector<16x32xf32>
    %c0_39 = arith.constant 0 : index
    %c0_40 = arith.constant 0 : index
    %58 = vector.load %arg14[%c0_39, %c0_40] : memref<32x32xf32, #tpu.memory_space<vmem>>, vector<32x32xf32>
    %cst_41 = arith.constant dense<0.000000e+00> : vector<16x32xf32>
    %59 = tpu.matmul %57, %58, %cst_41 {dimension_numbers = #tpu.dot_dimension_numbers<[1], [0], [0], [1], [0, 0, 1, 1], [], []>} : vector<16x32xf32>, vector<32x32xf32>, vector<16x32xf32> -> vector<16x32xf32>
    %60 = math.tanh %59 : vector<16x32xf32>
    %61 = vector.shape_cast %60 : vector<16x32xf32> to vector<2x8x32xf32>
    %cst_42 = arith.constant 0.176776692 : f32
    %62 = vector.broadcast %cst_42 : f32 to vector<2x8x32xf32>
    %63 = arith.mulf %61, %62 : vector<2x8x32xf32>
    "tpu.trace_start"() <{level = 10 : i32, message = "bth,bmh->btm"}> : () -> ()
    %cst_43 = arith.constant dense<0.000000e+00> : vector<2x8x16xf32>
    %64 = tpu.matmul %63, %56, %cst_43 {dimension_numbers = #tpu.dot_dimension_numbers<[2], [2], [1], [1], [0, 0, 0, 1, 1, 1], [0], [0]>} : vector<2x8x32xf32>, vector<2x16x32xf32>, vector<2x8x16xf32> -> vector<2x8x16xf32>
    "tpu.trace_stop"() : () -> ()
    %c0_44 = arith.constant 0 : index
    %c0_45 = arith.constant 0 : index
    %65 = vector.load %arg7[%c0_44, %c0_45] : memref<2x16xf32, #tpu.memory_space<vmem>>, vector<2x16xf32>
    %66 = vector.shape_cast %65 : vector<2x16xf32> to vector<2x1x16xf32>
    %67 = vector.broadcast %66 : vector<2x1x16xf32> to vector<2x8x16xf32>
    %68 = arith.addf %64, %67 : vector<2x8x16xf32>
    %cst_46 = arith.constant dense<0xFF800000> : vector<2x8xf32>
    %69 = vector.multi_reduction <maximumf>, %68, %cst_46 [2] : vector<2x8x16xf32> to vector<2x8xf32>
    %70 = vector.shape_cast %69 : vector<2x8xf32> to vector<2x8x1xf32>
    %71 = vector.broadcast %70 : vector<2x8x1xf32> to vector<2x8x16xf32>
    %72 = arith.subf %68, %71 : vector<2x8x16xf32>
    %73 = math.exp %72 : vector<2x8x16xf32>
    %cst_47 = arith.constant dense<0.000000e+00> : vector<2x8xf32>
    %74 = vector.multi_reduction <add>, %73, %cst_47 [2] : vector<2x8x16xf32> to vector<2x8xf32>
    %75 = vector.shape_cast %74 : vector<2x8xf32> to vector<2x8x1xf32>
    %76 = tpu.reciprocal %75 {approx = true} : vector<2x8x1xf32> -> vector<2x8x1xf32>
    %77 = vector.broadcast %76 : vector<2x8x1xf32> to vector<2x8x16xf32>
    %78 = arith.mulf %73, %77 : vector<2x8x16xf32>
    %c0_48 = arith.constant 0 : index
    %c0_49 = arith.constant 0 : index
    %c0_50 = arith.constant 0 : index
    %79 = vector.load %arg17[%c0_48, %c0_49, %c0_50] : memref<2x8x16xf32, #tpu.memory_space<vmem>>, vector<2x8x16xf32>
    tpu.vector_store %arg17[%c0_48, %c0_49, %c0_50], %78 {strides = array<i32>} : memref<2x8x16xf32, #tpu.memory_space<vmem>>, vector<2x8x16xf32>,
    "tpu.trace_start"() <{level = 10 : i32, message = "btm,bmh->bth"}> : () -> ()
    %cst_51 = arith.constant dense<0.000000e+00> : vector<2x8x32xf32>
    %80 = tpu.matmul %78, %56, %cst_51 {dimension_numbers = #tpu.dot_dimension_numbers<[2], [1], [1], [2], [0, 0, 0, 1, 1, 2], [0], [0]>} : vector<2x8x16xf32>, vector<2x16x32xf32>, vector<2x8x32xf32> -> vector<2x8x32xf32>
    "tpu.trace_stop"() : () -> ()
    %81 = tpu.concatenate %61, %80 in 2 : vector<2x8x32xf32>, vector<2x8x32xf32> -> vector<2x8x64xf32>
    %82 = vector.shape_cast %81 : vector<2x8x64xf32> to vector<16x64xf32>
    %c0_52 = arith.constant 0 : index
    %c0_53 = arith.constant 0 : index
    %83 = vector.load %arg15[%c0_52, %c0_53] : memref<64x32xf32, #tpu.memory_space<vmem>>, vector<64x32xf32>
    %cst_54 = arith.constant dense<0.000000e+00> : vector<16x32xf32>
    %84 = tpu.matmul %82, %83, %cst_54 {dimension_numbers = #tpu.dot_dimension_numbers<[1], [0], [0], [1], [0, 0, 1, 1], [], []>} : vector<16x64xf32>, vector<64x32xf32>, vector<16x32xf32> -> vector<16x32xf32>
    %85 = math.tanh %84 : vector<16x32xf32>
    %86 = vector.shape_cast %85 : vector<16x32xf32> to vector<2x8x32xf32>
    %c0_55 = arith.constant 0 : index
    %c0_56 = arith.constant 0 : index
    %c0_57 = arith.constant 0 : index
    %87 = vector.load %arg16[%c0_55, %c0_56, %c0_57] : memref<2x8x32xf32, #tpu.memory_space<vmem>>, vector<2x8x32xf32>
    tpu.vector_store %arg16[%c0_55, %c0_56, %c0_57], %86 {strides = array<i32>} : memref<2x8x32xf32, #tpu.memory_space<vmem>>, vector<2x8x32xf32>,
    return
  }
}

</mosaic_0001>

<llo_original>
// kernel: fused_forward.1
$region0: #{fused_forward.1}
  #allocation0 [shape = 'u32[]', space=smem, size = 0x4, offset = 0x4, fixed_abs, tag = 'smem constant byte address 0x4 - core index']
  #allocation1 [shape = 'u32[144,128]{1,0:T(1,128)}', space=vmem, size = 0x12000, scoped, tag = 'internal scratch']
  %s0 = inlined_call_operand.vmem [shape: f32[16,32], index: 0, kind: input, shape index: {}]
  %s1 = inlined_call_operand.vmem [shape: f32[2,64], index: 1, kind: input, shape index: {}]
  %s2 = inlined_call_operand.vmem [shape: f32[16,32], index: 2, kind: input, shape index: {}]
  %s3 = inlined_call_operand.vmem [shape: f32[1,32], index: 3, kind: input, shape index: {}]
  %s4 = inlined_call_operand.vmem [shape: f32[16,32], index: 4, kind: input, shape index: {}]
  %s5 = inlined_call_operand.vmem [shape: f32[16,32], index: 5, kind: input, shape index: {}]
  %s6 = inlined_call_operand.vmem [shape: f32[2,8], index: 6, kind: input, shape index: {}]
  %s7 = inlined_call_operand.vmem [shape: f32[2,16], index: 7, kind: input, shape index: {}]
  %s8 = inlined_call_operand.vmem [shape: f32[32,32], index: 8, kind: input, shape index: {}]
  %s9 = inlined_call_operand.vmem [shape: f32[64,32], index: 9, kind: input, shape index: {}]
  %s10 = inlined_call_operand.vmem [shape: f32[32,32], index: 10, kind: input, shape index: {}]
  %s11 = inlined_call_operand.vmem [shape: f32[32,32], index: 11, kind: input, shape index: {}]
  %s12 = inlined_call_operand.vmem [shape: f32[32,32], index: 12, kind: input, shape index: {}]
  %s13 = inlined_call_operand.vmem [shape: f32[32,32], index: 13, kind: input, shape index: {}]
  %s14 = inlined_call_operand.vmem [shape: f32[32,32], index: 14, kind: input, shape index: {}]
  %s15 = inlined_call_operand.vmem [shape: f32[64,32], index: 15, kind: input, shape index: {}]
  %s16 = inlined_call_operand.hbm [shape: f32[2,8,32], index: 16, kind: output, shape index: {0}]
  %s17 = inlined_call_operand.hbm [shape: f32[2,8,16], index: 17, kind: output, shape index: {1}]
  %s18 = inlined_call_operand.hbm [shape: f32[2,8], index: 18, kind: output, shape index: {2}]
  %s19 = inlined_call_operand.hbm [shape: f32[2,32], index: 19, kind: output, shape index: {3}]
  %20 = xla_tuple %s16, %s17, %s18, %s19
  %s21 = sld [smem:[#allocation0]]
  $region98: #{fused_forward.1} parent=0
    _
  %s23 = ssub.s32 1, %s21
  %s24 = scalar_select 0, %s23, %s21
  $region1: #{fused_forward.1} parent=0
    #allocation2 [shape = 'u8[8192]{0}', space=vmem, size = 0x2000, scoped, tag = 'output window, operand 0, single buffered']
    #allocation3 [shape = 's32[1]{0}', space=sflag, size = 0x4, scoped, tag = 'scoped memory for fused_forward.1']
    #allocation4 [shape = 'u8[8192]{0}', space=vmem, size = 0x2000, scoped, tag = 'output window, operand 1, single buffered']
    #allocation5 [shape = 's32[1]{0}', space=sflag, size = 0x4, scoped, tag = 'scoped memory for fused_forward.1']
    #allocation6 [shape = 'u8[1024]{0}', space=vmem, size = 0x400, scoped, tag = 'output window, operand 2, single buffered']
    #allocation7 [shape = 'u8[1024]{0}', space=vmem, size = 0x400, scoped, tag = 'output window, operand 3, single buffered']
    #allocation8 [shape = 's32[1]{0}', space=sflag, size = 0x4, scoped, tag = 'scoped memory for fused_forward.1']
    %25 = vsyncpa [#allocation3], 0
    %26 = vsyncpa [#allocation5], 0
    %27 = vsyncpa [#allocation8], 0
    // Predicated region
    $region2: #{fused_forward.1} parent=1 // pred_check
      _
    $region3: #{fused_forward.1} parent=1 // pred_check_branch
      %29 = sbr.rel (0) target = $region5
    $region4: #{fused_forward.1} parent=1 // pred_region
      _
    $region5: #{fused_forward.1} parent=1 // pred_fallthru
      _
    // Predicated region
    $region6: #{fused_forward.1} parent=1 // pred_check
      _
    $region7: #{fused_forward.1} parent=1 // pred_check_branch
      %31 = sbr.rel (0) target = $region9
    $region8: #{fused_forward.1} parent=1 // pred_region
      _
    $region9: #{fused_forward.1} parent=1 // pred_fallthru
      _
    // Predicated region
    $region10: #{fused_forward.1} parent=1 // pred_check
      _
    $region11: #{fused_forward.1} parent=1 // pred_check_branch
      %33 = sbr.rel (0) target = $region13
    $region12: #{fused_forward.1} parent=1 // pred_region
      _
    $region13: #{fused_forward.1} parent=1 // pred_fallthru
      _
    // Predicated region
    $region14: #{fused_forward.1} parent=1 // pred_check
      _
    $region15: #{fused_forward.1} parent=1 // pred_check_branch
      %35 = sbr.rel (0) target = $region17
    $region16: #{fused_forward.1} parent=1 // pred_region
      _
    $region17: #{fused_forward.1} parent=1 // pred_fallthru
      _
    // Predicated region
    $region18: #{fused_forward.1} parent=1 // pred_check
      _
    $region19: #{fused_forward.1} parent=1 // pred_check_branch
      %37 = sbr.rel (0) target = $region21
    $region20: #{fused_forward.1} parent=1 // pred_region
      _
    $region21: #{fused_forward.1} parent=1 // pred_fallthru
      _
    // Predicated region
    $region22: #{fused_forward.1} parent=1 // pred_check
      _
    $region23: #{fused_forward.1} parent=1 // pred_check_branch
      %39 = sbr.rel (0) target = $region25
    $region24: #{fused_forward.1} parent=1 // pred_region
      _
    $region25: #{fused_forward.1} parent=1 // pred_fallthru
      _
    // Predicated region
    $region26: #{fused_forward.1} parent=1 // pred_check
      _
    $region27: #{fused_forward.1} parent=1 // pred_check_branch
      %41 = sbr.rel (0) target = $region29
    $region28: #{fused_forward.1} parent=1 // pred_region
      _
    $region29: #{fused_forward.1} parent=1 // pred_fallthru
      _
    // Predicated region
    $region30: #{fused_forward.1} parent=1 // pred_check
      _
    $region31: #{fused_forward.1} parent=1 // pred_check_branch
      %43 = sbr.rel (0) target = $region33
    $region32: #{fused_forward.1} parent=1 // pred_region
      _
    $region33: #{fused_forward.1} parent=1 // pred_fallthru
      _
    // Predicated region
    $region34: #{fused_forward.1} parent=1 // pred_check
      _
    $region35: #{fused_forward.1} parent=1 // pred_check_branch
      %45 = sbr.rel (0) target = $region37
    $region36: #{fused_forward.1} parent=1 // pred_region
      _
    $region37: #{fused_forward.1} parent=1 // pred_fallthru
      _
    // Predicated region
    $region38: #{fused_forward.1} parent=1 // pred_check
      _
    $region39: #{fused_forward.1} parent=1 // pred_check_branch
      %47 = sbr.rel (0) target = $region41
    $region40: #{fused_forward.1} parent=1 // pred_region
      _
    $region41: #{fused_forward.1} parent=1 // pred_fallthru
      _
    // Predicated region
    $region42: #{fused_forward.1} parent=1 // pred_check
      _
    $region43: #{fused_forward.1} parent=1 // pred_check_branch
      %49 = sbr.rel (0) target = $region45
    $region44: #{fused_forward.1} parent=1 // pred_region
      _
    $region45: #{fused_forward.1} parent=1 // pred_fallthru
      _
    // Predicated region
    $region46: #{fused_forward.1} parent=1 // pred_check
      _
    $region47: #{fused_forward.1} parent=1 // pred_check_branch
      %51 = sbr.rel (0) target = $region49
    $region48: #{fused_forward.1} parent=1 // pred_region
      _
    $region49: #{fused_forward.1} parent=1 // pred_fallthru
      _
    // Predicated region
    $region50: #{fused_forward.1} parent=1 // pred_check
      _
    $region51: #{fused_forward.1} parent=1 // pred_check_branch
      %53 = sbr.rel (0) target = $region53
    $region52: #{fused_forward.1} parent=1 // pred_region
      _
    $region53: #{fused_forward.1} parent=1 // pred_fallthru
      _
    // Predicated region
    $region54: #{fused_forward.1} parent=1 // pred_check
      _
    $region55: #{fused_forward.1} parent=1 // pred_check_branch
      %55 = sbr.rel (0) target = $region57
    $region56: #{fused_forward.1} parent=1 // pred_region
      _
    $region57: #{fused_forward.1} parent=1 // pred_fallthru
      _
    // Predicated region
    $region58: #{fused_forward.1} parent=1 // pred_check
      _
    $region59: #{fused_forward.1} parent=1 // pred_check_branch
      %57 = sbr.rel (0) target = $region61
    $region60: #{fused_forward.1} parent=1 // pred_region
      _
    $region61: #{fused_forward.1} parent=1 // pred_fallthru
      _
    // Predicated region
    $region62: #{fused_forward.1} parent=1 // pred_check
      _
    $region63: #{fused_forward.1} parent=1 // pred_check_branch
      %59 = sbr.rel (0) target = $region65
    $region64: #{fused_forward.1} parent=1 // pred_region
      _
    $region65: #{fused_forward.1} parent=1 // pred_fallthru
      _
    %v60 = vld [vmem:[%s0] sm:$0xff]
    %v61 = vld [vmem:[%s0 + $0x8] sm:$0xff]
    %v62 = vld [vmem:[%s8] sm:$0xff]
    %v63 = vld [vmem:[%s8 + $0x8] sm:$0xff]
    %v64 = vld [vmem:[%s8 + $0x10] sm:$0xff]
    %v65 = vld [vmem:[%s8 + $0x18] sm:$0xff]
    %vm66 = vcmask 261120
    %v68 = vsel %vm66, %v60, 0
    %v71 = vsel %vm66, %v61, 0
    %73 = vmatprep.subr.mxu0 0.0
    %74 = vmatpush1.msra.mxu0 0.0
    %75 = vmatprep.subr.mxu0 0.0
    %76 = vmatpush1.msra.mxu0 0.0
    %77 = vmatprep.subr.mxu0 0.0
    %78 = vmatpush1.msra.mxu0 0.0
    %79 = vmatprep.subr.mxu0 0.0
    %80 = vmatpush1.msra.mxu0 0.0
    %81 = vmatprep.subr.mxu0 0.0
    %82 = vmatpush1.msra.mxu0 0.0
    %83 = vmatprep.subr.mxu0 0.0
    %84 = vmatpush1.msra.mxu0 0.0
    %85 = vmatprep.subr.mxu0 0.0
    %86 = vmatpush1.msra.mxu0 0.0
    %87 = vmatprep.subr.mxu0 0.0
    %88 = vmatpush1.msra.mxu0 0.0
    %89 = vmatprep.subr.mxu0 0.0
    %90 = vmatpush1.msra.mxu0 0.0
    %91 = vmatprep.subr.mxu0 0.0
    %92 = vmatpush1.msra.mxu0 0.0
    %93 = vmatprep.subr.mxu0 0.0
    %94 = vmatpush1.msra.mxu0 0.0
    %95 = vmatprep.subr.mxu0 0.0
    %96 = vmatpush1.msra.mxu0 0.0
    %97 = vmatprep.subr.mxu0 0.0
    %98 = vmatpush1.msra.mxu0 %v65
    %99 = vmatprep.subr.mxu0 0.0
    %100 = vmatpush1.msra.mxu0 %v64
    %101 = vmatprep.subr.mxu0 0.0
    %102 = vmatpush1.msra.mxu0 %v63
    %103 = vmatprep.subr.mxu0 0.0
    %104 = vmatpush1.msra.mxu0 %v62
    %105 = vmatprep.subr.mxu0 0.0
    %106 = vmatpush2.msra.mxu0 0.0
    %107 = vmatprep.subr.mxu0 0.0
    %108 = vmatpush2.msra.mxu0 0.0
    %109 = vmatprep.subr.mxu0 0.0
    %110 = vmatpush2.msra.mxu0 0.0
    %111 = vmatprep.subr.mxu0 0.0
    %112 = vmatpush2.msra.mxu0 0.0
    %113 = vmatprep.subr.mxu0 0.0
    %114 = vmatpush2.msra.mxu0 0.0
    %115 = vmatprep.subr.mxu0 0.0
    %116 = vmatpush2.msra.mxu0 0.0
    %117 = vmatprep.subr.mxu0 0.0
    %118 = vmatpush2.msra.mxu0 0.0
    %119 = vmatprep.subr.mxu0 0.0
    %120 = vmatpush2.msra.mxu0 0.0
    %121 = vmatprep.subr.mxu0 0.0
    %122 = vmatpush2.msra.mxu0 0.0
    %123 = vmatprep.subr.mxu0 0.0
    %124 = vmatpush2.msra.mxu0 0.0
    %125 = vmatprep.subr.mxu0 0.0
    %126 = vmatpush2.msra.mxu0 0.0
    %127 = vmatprep.subr.mxu0 0.0
    %128 = vmatpush2.msra.mxu0 0.0
    %129 = vmatprep.subr.mxu0 0.0
    %130 = vmatpush2.msra.mxu0 0.0
    %131 = vmatprep.subr.mxu0 0.0
    %132 = vmatpush2.msra.mxu0 0.0
    %133 = vmatprep.subr.mxu0 0.0
    %134 = vmatpush2.msra.mxu0 0.0
    %135 = vmatprep.subr.mxu0 0.0
    %136 = vmatpush2.msra.mxu0 0.0
    %137 = vmatprep.mubr.f32.mxu0 0.0
    %138 = vmatmul.mubr.f32.gmra.mxu0 %v68
    %v139 = vpop.f32.mrf.mxu0
    %v140 = vadd.f32 0.0, %v139
    %v141 = vpop.f32.mrf.mxu0
    %142 = vmatprep.mubr.f32.mxu0 0.0
    %143 = vmatmul.mubr.f32.gmra.mxu0 %v71
    %v144 = vpop.f32.mrf.mxu0
    %v145 = vadd.f32 0.0, %v144
    %v146 = vpop.f32.mrf.mxu0
    %147 = vdwg.mxu0
    %v148 = vtanh.pop %v140
    %v149 = vtanh.pop %v145
    %v150 = vld [vmem:[%s1] sm:$0x3]
    %v151 = vld [vmem:[%s9] sm:$0xff]
    %v152 = vld [vmem:[%s9 + $0x8] sm:$0xff]
    %v153 = vld [vmem:[%s9 + $0x10] sm:$0xff]
    %v154 = vld [vmem:[%s9 + $0x18] sm:$0xff]
    %v155 = vld [vmem:[%s9 + $0x20] sm:$0xff]
    %v156 = vld [vmem:[%s9 + $0x28] sm:$0xff]
    %v157 = vld [vmem:[%s9 + $0x30] sm:$0xff]
    %v158 = vld [vmem:[%s9 + $0x38] sm:$0xff]
    %vm159 = vcmask 523264
    %v161 = vsel %vm159, %v150, 0
    %163 = vmatprep.subr.mxu0 0.0
    %164 = vmatpush1.msra.mxu0 0.0
    %165 = vmatprep.subr.mxu0 0.0
    %166 = vmatpush1.msra.mxu0 0.0
    %167 = vmatprep.subr.mxu0 0.0
    %168 = vmatpush1.msra.mxu0 0.0
    %169 = vmatprep.subr.mxu0 0.0
    %170 = vmatpush1.msra.mxu0 0.0
    %171 = vmatprep.subr.mxu0 0.0
    %172 = vmatpush1.msra.mxu0 0.0
    %173 = vmatprep.subr.mxu0 0.0
    %174 = vmatpush1.msra.mxu0 0.0
    %175 = vmatprep.subr.mxu0 0.0
    %176 = vmatpush1.msra.mxu0 0.0
    %177 = vmatprep.subr.mxu0 0.0
    %178 = vmatpush1.msra.mxu0 0.0
    %179 = vmatprep.subr.mxu0 0.0
    %180 = vmatpush1.msra.mxu0 %v158
    %181 = vmatprep.subr.mxu0 0.0
    %182 = vmatpush1.msra.mxu0 %v157
    %183 = vmatprep.subr.mxu0 0.0
    %184 = vmatpush1.msra.mxu0 %v156
    %185 = vmatprep.subr.mxu0 0.0
    %186 = vmatpush1.msra.mxu0 %v155
    %187 = vmatprep.subr.mxu0 0.0
    %188 = vmatpush1.msra.mxu0 %v154
    %189 = vmatprep.subr.mxu0 0.0
    %190 = vmatpush1.msra.mxu0 %v153
    %191 = vmatprep.subr.mxu0 0.0
    %192 = vmatpush1.msra.mxu0 %v152
    %193 = vmatprep.subr.mxu0 0.0
    %194 = vmatpush1.msra.mxu0 %v151
    %195 = vmatprep.subr.mxu0 0.0
    %196 = vmatpush2.msra.mxu0 0.0
    %197 = vmatprep.subr.mxu0 0.0
    %198 = vmatpush2.msra.mxu0 0.0
    %199 = vmatprep.subr.mxu0 0.0
    %200 = vmatpush2.msra.mxu0 0.0
    %201 = vmatprep.subr.mxu0 0.0
    %202 = vmatpush2.msra.mxu0 0.0
    %203 = vmatprep.subr.mxu0 0.0
    %204 = vmatpush2.msra.mxu0 0.0
    %205 = vmatprep.subr.mxu0 0.0
    %206 = vmatpush2.msra.mxu0 0.0
    %207 = vmatprep.subr.mxu0 0.0
    %208 = vmatpush2.msra.mxu0 0.0
    %209 = vmatprep.subr.mxu0 0.0
    %210 = vmatpush2.msra.mxu0 0.0
    %211 = vmatprep.subr.mxu0 0.0
    %212 = vmatpush2.msra.mxu0 0.0
    %213 = vmatprep.subr.mxu0 0.0
    %214 = vmatpush2.msra.mxu0 0.0
    %215 = vmatprep.subr.mxu0 0.0
    %216 = vmatpush2.msra.mxu0 0.0
    %217 = vmatprep.subr.mxu0 0.0
    %218 = vmatpush2.msra.mxu0 0.0
    %219 = vmatprep.subr.mxu0 0.0
    %220 = vmatpush2.msra.mxu0 0.0
    %221 = vmatprep.subr.mxu0 0.0
    %222 = vmatpush2.msra.mxu0 0.0
    %223 = vmatprep.subr.mxu0 0.0
    %224 = vmatpush2.msra.mxu0 0.0
    %225 = vmatprep.subr.mxu0 0.0
    %226 = vmatpush2.msra.mxu0 0.0
    %227 = vmatprep.mubr.f32.mxu0 0.0
    %228 = vmatmul.mubr.f32.gmra.mxu0 %v161
    %v229 = vpop.f32.mrf.mxu0
    %v230 = vadd.f32 0.0, %v229
    %v231 = vpop.f32.mrf.mxu0
    %232 = vdwg.mxu0
    %v233 = vtanh.pop %v230
    %v236 = vunpack.c.l.s4 1966171168
    %v237 = vunpack.c.0.s8 %v236
    %v238 = vlaneseq
    %v239 = vshrl.u32 %v238, 7
    %v240 = vsub.s32 %v237, %v239
    %v241 = vrot.slane %v233, %v240
    %v242 = vcombine.high %v241, %v241
    %v244 = vunpack.c.l.s4 1966171168
    %v245 = vunpack.c.0.s8 %v244
    %v246 = vlaneseq
    %v247 = vshrl.u32 %v246, 7
    %v248 = vsub.s32 %v245, %v247
    %v249 = vrot.slane %v241, %v248
    %v251 = vunpack.c.l.s4 1966171168
    %v252 = vunpack.c.0.s8 %v251
    %v253 = vlaneseq
    %v254 = vshrl.u32 %v253, 7
    %v255 = vsub.s32 %v252, %v254
    %v256 = vrot.slane %v242, %v255
    %v257 = vlaneseq
    %v258 = vshrl.u32 %v257, 7
    %v259 = vsub.s32 0, %v258
    %v260 = vrot.slane %v249, %v259
    %v261 = vlaneseq
    %v262 = vshrl.u32 %v261, 7
    %v263 = vsub.s32 0, %v262
    %v264 = vrot.slane %v256, %v263
    %v267 = vmul.f32 %v260, %v148
    %v268 = vmul.f32 %v264, %v149
    %v269 = vsel %vm66, %v267, 0.0
    %270 = vadd.xlane.f32.xlu0 %v269
    %v271 = vpop.xlane.xlu0 %270
    %v272 = vsel %vm66, %v268, 0.0
    %273 = vadd.xlane.f32.xlu0 %v272
    %v274 = vpop.xlane.xlu0 %273
    %v275 = vmul.f32 %v271, 0.17677669
    %v276 = vmul.f32 %v274, 0.17677669
    %v277 = vxor.u32 %v275, 2147483648
    %v278 = vxor.u32 %v276, 2147483648
    %v279 = vmul.f32 %v277, 1.442695
    %v280 = vpow.pop %v279
    %v281 = vmul.f32 %v278, 1.442695
    %v282 = vpow.pop %v281
    %v283 = vadd.f32 %v280, 1.0
    %v284 = vadd.f32 %v282, 1.0
    %v285 = vrcp.pop %v283
    %v286 = vmul.f32 1.0, %v285
    %v287 = vrcp.pop %v284
    %v288 = vmul.f32 1.0, %v287
    %v291 = vlaneseq
    %v292 = vand.u32 %v291, 127
    %v293 = vlaneseq
    %v294 = vshrl.u32 %v293, 7
    %v295 = vsub.s32 %v292, %v294
    %v296 = vrot.slane %v286, %v295
    %v297 = vlaneseq
    %v298 = vshrl.u32 %v297, 7
    %v299 = vsub.s32 %v292, %v298
    %v300 = vrot.slane %v288, %v299
    %vm301 = vcmask 1041409
    %v302 = vsel %vm301, %v300, %v296
    %vm304 = vcmask 58368
    %305 = vst.msk [vmem:[#allocation6] sm:$0x3] %vm304, %v302
    %v306 = vld [vmem:[%s10] sm:$0xff]
    %v307 = vld [vmem:[%s10 + $0x8] sm:$0xff]
    %v308 = vld [vmem:[%s10 + $0x10] sm:$0xff]
    %v309 = vld [vmem:[%s10 + $0x18] sm:$0xff]
    %v310 = vsel %vm66, %v233, 0
    %312 = vmatprep.subr.mxu0 0.0
    %313 = vmatpush1.msra.mxu0 0.0
    %314 = vmatprep.subr.mxu0 0.0
    %315 = vmatpush1.msra.mxu0 0.0
    %316 = vmatprep.subr.mxu0 0.0
    %317 = vmatpush1.msra.mxu0 0.0
    %318 = vmatprep.subr.mxu0 0.0
    %319 = vmatpush1.msra.mxu0 0.0
    %320 = vmatprep.subr.mxu0 0.0
    %321 = vmatpush1.msra.mxu0 0.0
    %322 = vmatprep.subr.mxu0 0.0
    %323 = vmatpush1.msra.mxu0 0.0
    %324 = vmatprep.subr.mxu0 0.0
    %325 = vmatpush1.msra.mxu0 0.0
    %326 = vmatprep.subr.mxu0 0.0
    %327 = vmatpush1.msra.mxu0 0.0
    %328 = vmatprep.subr.mxu0 0.0
    %329 = vmatpush1.msra.mxu0 0.0
    %330 = vmatprep.subr.mxu0 0.0
    %331 = vmatpush1.msra.mxu0 0.0
    %332 = vmatprep.subr.mxu0 0.0
    %333 = vmatpush1.msra.mxu0 0.0
    %334 = vmatprep.subr.mxu0 0.0
    %335 = vmatpush1.msra.mxu0 0.0
    %336 = vmatprep.subr.mxu0 0.0
    %337 = vmatpush1.msra.mxu0 %v309
    %338 = vmatprep.subr.mxu0 0.0
    %339 = vmatpush1.msra.mxu0 %v308
    %340 = vmatprep.subr.mxu0 0.0
    %341 = vmatpush1.msra.mxu0 %v307
    %342 = vmatprep.subr.mxu0 0.0
    %343 = vmatpush1.msra.mxu0 %v306
    %344 = vmatprep.subr.mxu0 0.0
    %345 = vmatpush2.msra.mxu0 0.0
    %346 = vmatprep.subr.mxu0 0.0
    %347 = vmatpush2.msra.mxu0 0.0
    %348 = vmatprep.subr.mxu0 0.0
    %349 = vmatpush2.msra.mxu0 0.0
    %350 = vmatprep.subr.mxu0 0.0
    %351 = vmatpush2.msra.mxu0 0.0
    %352 = vmatprep.subr.mxu0 0.0
    %353 = vmatpush2.msra.mxu0 0.0
    %354 = vmatprep.subr.mxu0 0.0
    %355 = vmatpush2.msra.mxu0 0.0
    %356 = vmatprep.subr.mxu0 0.0
    %357 = vmatpush2.msra.mxu0 0.0
    %358 = vmatprep.subr.mxu0 0.0
    %359 = vmatpush2.msra.mxu0 0.0
    %360 = vmatprep.subr.mxu0 0.0
    %361 = vmatpush2.msra.mxu0 0.0
    %362 = vmatprep.subr.mxu0 0.0
    %363 = vmatpush2.msra.mxu0 0.0
    %364 = vmatprep.subr.mxu0 0.0
    %365 = vmatpush2.msra.mxu0 0.0
    %366 = vmatprep.subr.mxu0 0.0
    %367 = vmatpush2.msra.mxu0 0.0
    %368 = vmatprep.subr.mxu0 0.0
    %369 = vmatpush2.msra.mxu0 0.0
    %370 = vmatprep.subr.mxu0 0.0
    %371 = vmatpush2.msra.mxu0 0.0
    %372 = vmatprep.subr.mxu0 0.0
    %373 = vmatpush2.msra.mxu0 0.0
    %374 = vmatprep.subr.mxu0 0.0
    %375 = vmatpush2.msra.mxu0 0.0
    %376 = vmatprep.mubr.f32.mxu0 0.0
    %377 = vmatmul.mubr.f32.gmra.mxu0 %v310
    %v378 = vpop.f32.mrf.mxu0
    %v379 = vadd.f32 0.0, %v378
    %v380 = vpop.f32.mrf.mxu0
    %381 = vdwg.mxu0
    %v382 = vtanh.pop %v379
    %vm383 = vcmask 254976
    %384 = vst.msk [vmem:[#allocation7] sm:$0x3] %vm383, %v382
    %vm385 = vcmp.gt.f32.partialorder %v286, 0.5
    %vm386 = vcmp.gt.f32.partialorder %v288, 0.5
    %v387 = vld [vmem:[%s6] sm:$0x3]
    %vm388 = vcmp.gt.f32.partialorder %v387, 0.5
    %v389 = vsel %vm388, 1, 0
    %v390 = vlaneseq
    %v391 = vshrl.u32 %v390, 7
    %v392 = vsub.s32 0, %v391
    %v393 = vrot.slane %v389, %v392
    %395 = vbcast.lane.b32.xlu0 %v393, 256
    %v396 = vpop.permute.xlu0 %395
    %v397 = vlaneseq
    %v398 = vshrl.u32 %v397, 7
    %v399 = vsub.s32 1, %v398
    %v400 = vrot.slane %v389, %v399
    %402 = vbcast.lane.b32.xlu0 %v400, 256
    %v403 = vpop.permute.xlu0 %402
    %vm404 = vcmp.ne.s32.totalorder %v396, 0
    %vm405 = vcmp.ne.s32.totalorder %v403, 0
    %vm406 = vmand %vm385, %vm404
    %vm407 = vmand %vm386, %vm405
    %v408 = vld [vmem:[%s2] sm:$0xff]
    %v409 = vld [vmem:[%s2 + $0x8] sm:$0xff]
    %v410 = vld [vmem:[%s3] sm:$0x1]
    %v411 = vsel %vm406, 1, 0
    %v412 = vsel %vm407, 1, 0
    %413 = vset.pattern.permute.xlu0 0
    %414 = vperm.xlu0 %413, %v411
    %v415 = vpop.permute.xlu0 %414
    %416 = vset.pattern.permute.xlu0 0
    %417 = vperm.xlu0 %416, %v412
    %v418 = vpop.permute.xlu0 %417
    %vm419 = vcmp.eq.s32.totalorder %v415, 1
    %vm420 = vcmp.eq.s32.totalorder %v418, 1
    %v422 = vlaneseq
    %v423 = vshrl.u32 %v422, 7
    %v424 = vsub.s32 0, %v423
    %v425 = vrot.slane %v410, %v424
    %v427 = vsel %vm419, %v408, %v425
    %v428 = vsel %vm420, %v409, %v425
    %v429 = vld [vmem:[%s4] sm:$0xff]
    %v430 = vld [vmem:[%s4 + $0x8] sm:$0xff]
    %v431 = vld [vmem:[%s11] sm:$0xff]
    %v432 = vld [vmem:[%s11 + $0x8] sm:$0xff]
    %v433 = vld [vmem:[%s11 + $0x10] sm:$0xff]
    %v434 = vld [vmem:[%s11 + $0x18] sm:$0xff]
    %v436 = vsel %vm66, %v429, 0
    %v439 = vsel %vm66, %v430, 0
    %441 = vmatprep.subr.mxu0 0.0
    %442 = vmatpush1.msra.mxu0 0.0
    %443 = vmatprep.subr.mxu0 0.0
    %444 = vmatpush1.msra.mxu0 0.0
    %445 = vmatprep.subr.mxu0 0.0
    %446 = vmatpush1.msra.mxu0 0.0
    %447 = vmatprep.subr.mxu0 0.0
    %448 = vmatpush1.msra.mxu0 0.0
    %449 = vmatprep.subr.mxu0 0.0
    %450 = vmatpush1.msra.mxu0 0.0
    %451 = vmatprep.subr.mxu0 0.0
    %452 = vmatpush1.msra.mxu0 0.0
    %453 = vmatprep.subr.mxu0 0.0
    %454 = vmatpush1.msra.mxu0 0.0
    %455 = vmatprep.subr.mxu0 0.0
    %456 = vmatpush1.msra.mxu0 0.0
    %457 = vmatprep.subr.mxu0 0.0
    %458 = vmatpush1.msra.mxu0 0.0
    %459 = vmatprep.subr.mxu0 0.0
    %460 = vmatpush1.msra.mxu0 0.0
    %461 = vmatprep.subr.mxu0 0.0
    %462 = vmatpush1.msra.mxu0 0.0
    %463 = vmatprep.subr.mxu0 0.0
    %464 = vmatpush1.msra.mxu0 0.0
    %465 = vmatprep.subr.mxu0 0.0
    %466 = vmatpush1.msra.mxu0 %v434
    %467 = vmatprep.subr.mxu0 0.0
    %468 = vmatpush1.msra.mxu0 %v433
    %469 = vmatprep.subr.mxu0 0.0
    %470 = vmatpush1.msra.mxu0 %v432
    %471 = vmatprep.subr.mxu0 0.0
    %472 = vmatpush1.msra.mxu0 %v431
    %473 = vmatprep.subr.mxu0 0.0
    %474 = vmatpush2.msra.mxu0 0.0
    %475 = vmatprep.subr.mxu0 0.0
    %476 = vmatpush2.msra.mxu0 0.0
    %477 = vmatprep.subr.mxu0 0.0
    %478 = vmatpush2.msra.mxu0 0.0
    %479 = vmatprep.subr.mxu0 0.0
    %480 = vmatpush2.msra.mxu0 0.0
    %481 = vmatprep.subr.mxu0 0.0
    %482 = vmatpush2.msra.mxu0 0.0
    %483 = vmatprep.subr.mxu0 0.0
    %484 = vmatpush2.msra.mxu0 0.0
    %485 = vmatprep.subr.mxu0 0.0
    %486 = vmatpush2.msra.mxu0 0.0
    %487 = vmatprep.subr.mxu0 0.0
    %488 = vmatpush2.msra.mxu0 0.0
    %489 = vmatprep.subr.mxu0 0.0
    %490 = vmatpush2.msra.mxu0 0.0
    %491 = vmatprep.subr.mxu0 0.0
    %492 = vmatpush2.msra.mxu0 0.0
    %493 = vmatprep.subr.mxu0 0.0
    %494 = vmatpush2.msra.mxu0 0.0
    %495 = vmatprep.subr.mxu0 0.0
    %496 = vmatpush2.msra.mxu0 0.0
    %497 = vmatprep.subr.mxu0 0.0
    %498 = vmatpush2.msra.mxu0 0.0
    %499 = vmatprep.subr.mxu0 0.0
    %500 = vmatpush2.msra.mxu0 0.0
    %501 = vmatprep.subr.mxu0 0.0
    %502 = vmatpush2.msra.mxu0 0.0
    %503 = vmatprep.subr.mxu0 0.0
    %504 = vmatpush2.msra.mxu0 0.0
    %505 = vmatprep.mubr.f32.mxu0 0.0
    %506 = vmatmul.mubr.f32.gmra.mxu0 %v436
    %v507 = vpop.f32.mrf.mxu0
    %v508 = vadd.f32 0.0, %v507
    %v509 = vpop.f32.mrf.mxu0
    %510 = vmatprep.mubr.f32.mxu0 0.0
    %511 = vmatmul.mubr.f32.gmra.mxu0 %v439
    %v512 = vpop.f32.mrf.mxu0
    %v513 = vadd.f32 0.0, %v512
    %v514 = vpop.f32.mrf.mxu0
    %515 = vdwg.mxu0
    %v516 = vld [vmem:[%s13] sm:$0xff]
    %v517 = vld [vmem:[%s13 + $0x8] sm:$0xff]
    %v518 = vld [vmem:[%s13 + $0x10] sm:$0xff]
    %v519 = vld [vmem:[%s13 + $0x18] sm:$0xff]
    %v521 = vsel %vm66, %v382, 0
    %523 = vmatprep.subr.mxu0 0.0
    %524 = vmatpush1.msra.mxu0 0.0
    %525 = vmatprep.subr.mxu0 0.0
    %526 = vmatpush1.msra.mxu0 0.0
    %527 = vmatprep.subr.mxu0 0.0
    %528 = vmatpush1.msra.mxu0 0.0
    %529 = vmatprep.subr.mxu0 0.0
    %530 = vmatpush1.msra.mxu0 0.0
    %531 = vmatprep.subr.mxu0 0.0
    %532 = vmatpush1.msra.mxu0 0.0
    %533 = vmatprep.subr.mxu0 0.0
    %534 = vmatpush1.msra.mxu0 0.0
    %535 = vmatprep.subr.mxu0 0.0
    %536 = vmatpush1.msra.mxu0 0.0
    %537 = vmatprep.subr.mxu0 0.0
    %538 = vmatpush1.msra.mxu0 0.0
    %539 = vmatprep.subr.mxu0 0.0
    %540 = vmatpush1.msra.mxu0 0.0
    %541 = vmatprep.subr.mxu0 0.0
    %542 = vmatpush1.msra.mxu0 0.0
    %543 = vmatprep.subr.mxu0 0.0
    %544 = vmatpush1.msra.mxu0 0.0
    %545 = vmatprep.subr.mxu0 0.0
    %546 = vmatpush1.msra.mxu0 0.0
    %547 = vmatprep.subr.mxu0 0.0
    %548 = vmatpush1.msra.mxu0 %v519
    %549 = vmatprep.subr.mxu0 0.0
    %550 = vmatpush1.msra.mxu0 %v518
    %551 = vmatprep.subr.mxu0 0.0
    %552 = vmatpush1.msra.mxu0 %v517
    %553 = vmatprep.subr.mxu0 0.0
    %554 = vmatpush1.msra.mxu0 %v516
    %555 = vmatprep.subr.mxu0 0.0
    %556 = vmatpush2.msra.mxu0 0.0
    %557 = vmatprep.subr.mxu0 0.0
    %558 = vmatpush2.msra.mxu0 0.0
    %559 = vmatprep.subr.mxu0 0.0
    %560 = vmatpush2.msra.mxu0 0.0
    %561 = vmatprep.subr.mxu0 0.0
    %562 = vmatpush2.msra.mxu0 0.0
    %563 = vmatprep.subr.mxu0 0.0
    %564 = vmatpush2.msra.mxu0 0.0
    %565 = vmatprep.subr.mxu0 0.0
    %566 = vmatpush2.msra.mxu0 0.0
    %567 = vmatprep.subr.mxu0 0.0
    %568 = vmatpush2.msra.mxu0 0.0
    %569 = vmatprep.subr.mxu0 0.0
    %570 = vmatpush2.msra.mxu0 0.0
    %571 = vmatprep.subr.mxu0 0.0
    %572 = vmatpush2.msra.mxu0 0.0
    %573 = vmatprep.subr.mxu0 0.0
    %574 = vmatpush2.msra.mxu0 0.0
    %575 = vmatprep.subr.mxu0 0.0
    %576 = vmatpush2.msra.mxu0 0.0
    %577 = vmatprep.subr.mxu0 0.0
    %578 = vmatpush2.msra.mxu0 0.0
    %579 = vmatprep.subr.mxu0 0.0
    %580 = vmatpush2.msra.mxu0 0.0
    %581 = vmatprep.subr.mxu0 0.0
    %582 = vmatpush2.msra.mxu0 0.0
    %583 = vmatprep.subr.mxu0 0.0
    %584 = vmatpush2.msra.mxu0 0.0
    %585 = vmatprep.subr.mxu0 0.0
    %586 = vmatpush2.msra.mxu0 0.0
    %587 = vmatprep.mubr.f32.mxu0 0.0
    %588 = vmatmul.mubr.f32.gmra.mxu0 %v521
    %v589 = vpop.f32.mrf.mxu0
    %v590 = vadd.f32 0.0, %v589
    %v591 = vpop.f32.mrf.mxu0
    %592 = vdwg.mxu0
    %v595 = vunpack.c.l.s4 1966171168
    %v596 = vunpack.c.0.s8 %v595
    %v597 = vlaneseq
    %v598 = vshrl.u32 %v597, 7
    %v599 = vsub.s32 %v596, %v598
    %v600 = vrot.slane %v590, %v599
    %v601 = vcombine.high %v600, %v600
    %v603 = vunpack.c.l.s4 1966171168
    %v604 = vunpack.c.0.s8 %v603
    %v605 = vlaneseq
    %v606 = vshrl.u32 %v605, 7
    %v607 = vsub.s32 %v604, %v606
    %v608 = vrot.slane %v600, %v607
    %v610 = vunpack.c.l.s4 1966171168
    %v611 = vunpack.c.0.s8 %v610
    %v612 = vlaneseq
    %v613 = vshrl.u32 %v612, 7
    %v614 = vsub.s32 %v611, %v613
    %v615 = vrot.slane %v601, %v614
    %v616 = vlaneseq
    %v617 = vshrl.u32 %v616, 7
    %v618 = vsub.s32 0, %v617
    %v619 = vrot.slane %v608, %v618
    %v620 = vlaneseq
    %v621 = vshrl.u32 %v620, 7
    %v622 = vsub.s32 0, %v621
    %v623 = vrot.slane %v615, %v622
    %v626 = vadd.f32 %v508, %v619
    %v627 = vadd.f32 %v513, %v623
    %v628 = vld [vmem:[%s12] sm:$0xff]
    %v629 = vld [vmem:[%s12 + $0x8] sm:$0xff]
    %v630 = vld [vmem:[%s12 + $0x10] sm:$0xff]
    %v631 = vld [vmem:[%s12 + $0x18] sm:$0xff]
    %v633 = vsel %vm66, %v427, 0
    %v636 = vsel %vm66, %v428, 0
    %638 = vmatprep.subr.mxu0 0.0
    %639 = vmatpush1.msra.mxu0 0.0
    %640 = vmatprep.subr.mxu0 0.0
    %641 = vmatpush1.msra.mxu0 0.0
    %642 = vmatprep.subr.mxu0 0.0
    %643 = vmatpush1.msra.mxu0 0.0
    %644 = vmatprep.subr.mxu0 0.0
    %645 = vmatpush1.msra.mxu0 0.0
    %646 = vmatprep.subr.mxu0 0.0
    %647 = vmatpush1.msra.mxu0 0.0
    %648 = vmatprep.subr.mxu0 0.0
    %649 = vmatpush1.msra.mxu0 0.0
    %650 = vmatprep.subr.mxu0 0.0
    %651 = vmatpush1.msra.mxu0 0.0
    %652 = vmatprep.subr.mxu0 0.0
    %653 = vmatpush1.msra.mxu0 0.0
    %654 = vmatprep.subr.mxu0 0.0
    %655 = vmatpush1.msra.mxu0 0.0
    %656 = vmatprep.subr.mxu0 0.0
    %657 = vmatpush1.msra.mxu0 0.0
    %658 = vmatprep.subr.mxu0 0.0
    %659 = vmatpush1.msra.mxu0 0.0
    %660 = vmatprep.subr.mxu0 0.0
    %661 = vmatpush1.msra.mxu0 0.0
    %662 = vmatprep.subr.mxu0 0.0
    %663 = vmatpush1.msra.mxu0 %v631
    %664 = vmatprep.subr.mxu0 0.0
    %665 = vmatpush1.msra.mxu0 %v630
    %666 = vmatprep.subr.mxu0 0.0
    %667 = vmatpush1.msra.mxu0 %v629
    %668 = vmatprep.subr.mxu0 0.0
    %669 = vmatpush1.msra.mxu0 %v628
    %670 = vmatprep.subr.mxu0 0.0
    %671 = vmatpush2.msra.mxu0 0.0
    %672 = vmatprep.subr.mxu0 0.0
    %673 = vmatpush2.msra.mxu0 0.0
    %674 = vmatprep.subr.mxu0 0.0
    %675 = vmatpush2.msra.mxu0 0.0
    %676 = vmatprep.subr.mxu0 0.0
    %677 = vmatpush2.msra.mxu0 0.0
    %678 = vmatprep.subr.mxu0 0.0
    %679 = vmatpush2.msra.mxu0 0.0
    %680 = vmatprep.subr.mxu0 0.0
    %681 = vmatpush2.msra.mxu0 0.0
    %682 = vmatprep.subr.mxu0 0.0
    %683 = vmatpush2.msra.mxu0 0.0
    %684 = vmatprep.subr.mxu0 0.0
    %685 = vmatpush2.msra.mxu0 0.0
    %686 = vmatprep.subr.mxu0 0.0
    %687 = vmatpush2.msra.mxu0 0.0
    %688 = vmatprep.subr.mxu0 0.0
    %689 = vmatpush2.msra.mxu0 0.0
    %690 = vmatprep.subr.mxu0 0.0
    %691 = vmatpush2.msra.mxu0 0.0
    %692 = vmatprep.subr.mxu0 0.0
    %693 = vmatpush2.msra.mxu0 0.0
    %694 = vmatprep.subr.mxu0 0.0
    %695 = vmatpush2.msra.mxu0 0.0
    %696 = vmatprep.subr.mxu0 0.0
    %697 = vmatpush2.msra.mxu0 0.0
    %698 = vmatprep.subr.mxu0 0.0
    %699 = vmatpush2.msra.mxu0 0.0
    %700 = vmatprep.subr.mxu0 0.0
    %701 = vmatpush2.msra.mxu0 0.0
    %702 = vmatprep.mubr.f32.mxu0 0.0
    %703 = vmatmul.mubr.f32.gmra.mxu0 %v633
    %v704 = vpop.f32.mrf.mxu0
    %v705 = vadd.f32 0.0, %v704
    %v706 = vpop.f32.mrf.mxu0
    %707 = vmatprep.mubr.f32.mxu0 0.0
    %708 = vmatmul.mubr.f32.gmra.mxu0 %v636
    %v709 = vpop.f32.mrf.mxu0
    %v710 = vadd.f32 0.0, %v709
    %v711 = vpop.f32.mrf.mxu0
    %712 = vdwg.mxu0
    %v713 = vtanh.pop %v626
    %v714 = vtanh.pop %v627
    %v715 = vtanh.pop %v705
    %v716 = vtanh.pop %v710
    %v717 = vld [vmem:[%s5] sm:$0xff]
    %v718 = vld [vmem:[%s5 + $0x8] sm:$0xff]
    %v719 = vld [vmem:[%s14] sm:$0xff]
    %v720 = vld [vmem:[%s14 + $0x8] sm:$0xff]
    %v721 = vld [vmem:[%s14 + $0x10] sm:$0xff]
    %v722 = vld [vmem:[%s14 + $0x18] sm:$0xff]
    %v724 = vsel %vm66, %v717, 0
    %v727 = vsel %vm66, %v718, 0
    %729 = vmatprep.subr.mxu0 0.0
    %730 = vmatpush1.msra.mxu0 0.0
    %731 = vmatprep.subr.mxu0 0.0
    %732 = vmatpush1.msra.mxu0 0.0
    %733 = vmatprep.subr.mxu0 0.0
    %734 = vmatpush1.msra.mxu0 0.0
    %735 = vmatprep.subr.mxu0 0.0
    %736 = vmatpush1.msra.mxu0 0.0
    %737 = vmatprep.subr.mxu0 0.0
    %738 = vmatpush1.msra.mxu0 0.0
    %739 = vmatprep.subr.mxu0 0.0
    %740 = vmatpush1.msra.mxu0 0.0
    %741 = vmatprep.subr.mxu0 0.0
    %742 = vmatpush1.msra.mxu0 0.0
    %743 = vmatprep.subr.mxu0 0.0
    %744 = vmatpush1.msra.mxu0 0.0
    %745 = vmatprep.subr.mxu0 0.0
    %746 = vmatpush1.msra.mxu0 0.0
    %747 = vmatprep.subr.mxu0 0.0
    %748 = vmatpush1.msra.mxu0 0.0
    %749 = vmatprep.subr.mxu0 0.0
    %750 = vmatpush1.msra.mxu0 0.0
    %751 = vmatprep.subr.mxu0 0.0
    %752 = vmatpush1.msra.mxu0 0.0
    %753 = vmatprep.subr.mxu0 0.0
    %754 = vmatpush1.msra.mxu0 %v722
    %755 = vmatprep.subr.mxu0 0.0
    %756 = vmatpush1.msra.mxu0 %v721
    %757 = vmatprep.subr.mxu0 0.0
    %758 = vmatpush1.msra.mxu0 %v720
    %759 = vmatprep.subr.mxu0 0.0
    %760 = vmatpush1.msra.mxu0 %v719
    %761 = vmatprep.subr.mxu0 0.0
    %762 = vmatpush2.msra.mxu0 0.0
    %763 = vmatprep.subr.mxu0 0.0
    %764 = vmatpush2.msra.mxu0 0.0
    %765 = vmatprep.subr.mxu0 0.0
    %766 = vmatpush2.msra.mxu0 0.0
    %767 = vmatprep.subr.mxu0 0.0
    %768 = vmatpush2.msra.mxu0 0.0
    %769 = vmatprep.subr.mxu0 0.0
    %770 = vmatpush2.msra.mxu0 0.0
    %771 = vmatprep.subr.mxu0 0.0
    %772 = vmatpush2.msra.mxu0 0.0
    %773 = vmatprep.subr.mxu0 0.0
    %774 = vmatpush2.msra.mxu0 0.0
    %775 = vmatprep.subr.mxu0 0.0
    %776 = vmatpush2.msra.mxu0 0.0
    %777 = vmatprep.subr.mxu0 0.0
    %778 = vmatpush2.msra.mxu0 0.0
    %779 = vmatprep.subr.mxu0 0.0
    %780 = vmatpush2.msra.mxu0 0.0
    %781 = vmatprep.subr.mxu0 0.0
    %782 = vmatpush2.msra.mxu0 0.0
    %783 = vmatprep.subr.mxu0 0.0
    %784 = vmatpush2.msra.mxu0 0.0
    %785 = vmatprep.subr.mxu0 0.0
    %786 = vmatpush2.msra.mxu0 0.0
    %787 = vmatprep.subr.mxu0 0.0
    %788 = vmatpush2.msra.mxu0 0.0
    %789 = vmatprep.subr.mxu0 0.0
    %790 = vmatpush2.msra.mxu0 0.0
    %791 = vmatprep.subr.mxu0 0.0
    %792 = vmatpush2.msra.mxu0 0.0
    %793 = vmatprep.mubr.f32.mxu0 0.0
    %794 = vmatmul.mubr.f32.gmra.mxu0 %v724
    %v795 = vpop.f32.mrf.mxu0
    %v796 = vadd.f32 0.0, %v795
    %v797 = vpop.f32.mrf.mxu0
    %798 = vmatprep.mubr.f32.mxu0 0.0
    %799 = vmatmul.mubr.f32.gmra.mxu0 %v727
    %v800 = vpop.f32.mrf.mxu0
    %v801 = vadd.f32 0.0, %v800
    %v802 = vpop.f32.mrf.mxu0
    %803 = vdwg.mxu0
    %v804 = vtanh.pop %v796
    %v805 = vtanh.pop %v801
    %v806 = vmul.f32 %v804, 0.17677669
    %v807 = vmul.f32 %v805, 0.17677669
    %v808 = vld [vmem:[%s7] sm:$0x3]
    %v811 = vunpack.c.l.s4 1966171168
    %v812 = vunpack.c.0.s8 %v811
    %v813 = vlaneseq
    %v814 = vshrl.u32 %v813, 7
    %v815 = vsub.s32 %v812, %v814
    %v816 = vrot.slane %v808, %v815
    %v817 = vcombine.high %v816, %v816
    %v819 = vunpack.c.l.s4 1966171168
    %v820 = vunpack.c.0.s8 %v819
    %v821 = vlaneseq
    %v822 = vshrl.u32 %v821, 7
    %v823 = vsub.s32 %v820, %v822
    %v824 = vrot.slane %v816, %v823
    %v826 = vunpack.c.l.s4 1966171168
    %v827 = vunpack.c.0.s8 %v826
    %v828 = vlaneseq
    %v829 = vshrl.u32 %v828, 7
    %v830 = vsub.s32 %v827, %v829
    %v831 = vrot.slane %v817, %v830
    %v832 = vlaneseq
    %v833 = vshrl.u32 %v832, 7
    %v834 = vsub.s32 0, %v833
    %v835 = vrot.slane %v824, %v834
    %v836 = vlaneseq
    %v837 = vshrl.u32 %v836, 7
    %v838 = vsub.s32 0, %v837
    %v839 = vrot.slane %v831, %v838
    %v843 = vsel %vm66, %v806, 0
    %v846 = vsel %vm66, %v713, 0
    %v849 = vsel %vm66, %v715, 0
    %851 = vmatprep.subr.mxu0 0.0
    %852 = vmatpush1.xpose.msra.mxu0 0.0
    %853 = vmatprep.subr.mxu0 0.0
    %854 = vmatpush1.xpose.msra.mxu0 0.0
    %855 = vmatprep.subr.mxu0 0.0
    %856 = vmatpush1.xpose.msra.mxu0 0.0
    %857 = vmatprep.subr.mxu0 0.0
    %858 = vmatpush1.xpose.msra.mxu0 0.0
    %859 = vmatprep.subr.mxu0 0.0
    %860 = vmatpush1.xpose.msra.mxu0 0.0
    %861 = vmatprep.subr.mxu0 0.0
    %862 = vmatpush1.xpose.msra.mxu0 0.0
    %863 = vmatprep.subr.mxu0 0.0
    %864 = vmatpush1.xpose.msra.mxu0 0.0
    %865 = vmatprep.subr.mxu0 0.0
    %866 = vmatpush1.xpose.msra.mxu0 0.0
    %867 = vmatprep.subr.mxu0 0.0
    %868 = vmatpush1.xpose.msra.mxu0 0.0
    %869 = vmatprep.subr.mxu0 0.0
    %870 = vmatpush1.xpose.msra.mxu0 0.0
    %871 = vmatprep.subr.mxu0 0.0
    %872 = vmatpush1.xpose.msra.mxu0 0.0
    %873 = vmatprep.subr.mxu0 0.0
    %874 = vmatpush1.xpose.msra.mxu0 0.0
    %875 = vmatprep.subr.mxu0 0.0
    %876 = vmatpush1.xpose.msra.mxu0 0.0
    %877 = vmatprep.subr.mxu0 0.0
    %878 = vmatpush1.xpose.msra.mxu0 0.0
    %879 = vmatprep.subr.mxu0 0.0
    %880 = vmatpush1.xpose.msra.mxu0 %v849
    %881 = vmatprep.subr.mxu0 0.0
    %882 = vmatpush1.xpose.msra.mxu0 %v846
    %883 = vmatprep.subr.mxu0 0.0
    %884 = vmatpush2.xpose.msra.mxu0 0.0
    %885 = vmatprep.subr.mxu0 0.0
    %886 = vmatpush2.xpose.msra.mxu0 0.0
    %887 = vmatprep.subr.mxu0 0.0
    %888 = vmatpush2.xpose.msra.mxu0 0.0
    %889 = vmatprep.subr.mxu0 0.0
    %890 = vmatpush2.xpose.msra.mxu0 0.0
    %891 = vmatprep.subr.mxu0 0.0
    %892 = vmatpush2.xpose.msra.mxu0 0.0
    %893 = vmatprep.subr.mxu0 0.0
    %894 = vmatpush2.xpose.msra.mxu0 0.0
    %895 = vmatprep.subr.mxu0 0.0
    %896 = vmatpush2.xpose.msra.mxu0 0.0
    %897 = vmatprep.subr.mxu0 0.0
    %898 = vmatpush2.xpose.msra.mxu0 0.0
    %899 = vmatprep.subr.mxu0 0.0
    %900 = vmatpush2.xpose.msra.mxu0 0.0
    %901 = vmatprep.subr.mxu0 0.0
    %902 = vmatpush2.xpose.msra.mxu0 0.0
    %903 = vmatprep.subr.mxu0 0.0
    %904 = vmatpush2.xpose.msra.mxu0 0.0
    %905 = vmatprep.subr.mxu0 0.0
    %906 = vmatpush2.xpose.msra.mxu0 0.0
    %907 = vmatprep.subr.mxu0 0.0
    %908 = vmatpush2.xpose.msra.mxu0 0.0
    %909 = vmatprep.subr.mxu0 0.0
    %910 = vmatpush2.xpose.msra.mxu0 0.0
    %911 = vmatprep.subr.mxu0 0.0
    %912 = vmatpush2.xpose.msra.mxu0 0.0
    %913 = vmatprep.subr.mxu0 0.0
    %914 = vmatpush2.xpose.msra.mxu0 0.0
    %915 = vmatprep.mubr.f32.mxu0 0.0
    %916 = vmatmul.mubr.f32.gmra.mxu0 %v843
    %v917 = vpop.f32.mrf.mxu0
    %v918 = vadd.f32 %v835, %v917
    %v919 = vpop.f32.mrf.mxu0
    %920 = vdwg.mxu0
    %v922 = vsel %vm66, %v807, 0
    %v925 = vsel %vm66, %v714, 0
    %v928 = vsel %vm66, %v716, 0
    %930 = vmatprep.subr.mxu0 0.0
    %931 = vmatpush1.xpose.msra.mxu0 0.0
    %932 = vmatprep.subr.mxu0 0.0
    %933 = vmatpush1.xpose.msra.mxu0 0.0
    %934 = vmatprep.subr.mxu0 0.0
    %935 = vmatpush1.xpose.msra.mxu0 0.0
    %936 = vmatprep.subr.mxu0 0.0
    %937 = vmatpush1.xpose.msra.mxu0 0.0
    %938 = vmatprep.subr.mxu0 0.0
    %939 = vmatpush1.xpose.msra.mxu0 0.0
    %940 = vmatprep.subr.mxu0 0.0
    %941 = vmatpush1.xpose.msra.mxu0 0.0
    %942 = vmatprep.subr.mxu0 0.0
    %943 = vmatpush1.xpose.msra.mxu0 0.0
    %944 = vmatprep.subr.mxu0 0.0
    %945 = vmatpush1.xpose.msra.mxu0 0.0
    %946 = vmatprep.subr.mxu0 0.0
    %947 = vmatpush1.xpose.msra.mxu0 0.0
    %948 = vmatprep.subr.mxu0 0.0
    %949 = vmatpush1.xpose.msra.mxu0 0.0
    %950 = vmatprep.subr.mxu0 0.0
    %951 = vmatpush1.xpose.msra.mxu0 0.0
    %952 = vmatprep.subr.mxu0 0.0
    %953 = vmatpush1.xpose.msra.mxu0 0.0
    %954 = vmatprep.subr.mxu0 0.0
    %955 = vmatpush1.xpose.msra.mxu0 0.0
    %956 = vmatprep.subr.mxu0 0.0
    %957 = vmatpush1.xpose.msra.mxu0 0.0
    %958 = vmatprep.subr.mxu0 0.0
    %959 = vmatpush1.xpose.msra.mxu0 %v928
    %960 = vmatprep.subr.mxu0 0.0
    %961 = vmatpush1.xpose.msra.mxu0 %v925
    %962 = vmatprep.subr.mxu0 0.0
    %963 = vmatpush2.xpose.msra.mxu0 0.0
    %964 = vmatprep.subr.mxu0 0.0
    %965 = vmatpush2.xpose.msra.mxu0 0.0
    %966 = vmatprep.subr.mxu0 0.0
    %967 = vmatpush2.xpose.msra.mxu0 0.0
    %968 = vmatprep.subr.mxu0 0.0
    %969 = vmatpush2.xpose.msra.mxu0 0.0
    %970 = vmatprep.subr.mxu0 0.0
    %971 = vmatpush2.xpose.msra.mxu0 0.0
    %972 = vmatprep.subr.mxu0 0.0
    %973 = vmatpush2.xpose.msra.mxu0 0.0
    %974 = vmatprep.subr.mxu0 0.0
    %975 = vmatpush2.xpose.msra.mxu0 0.0
    %976 = vmatprep.subr.mxu0 0.0
    %977 = vmatpush2.xpose.msra.mxu0 0.0
    %978 = vmatprep.subr.mxu0 0.0
    %979 = vmatpush2.xpose.msra.mxu0 0.0
    %980 = vmatprep.subr.mxu0 0.0
    %981 = vmatpush2.xpose.msra.mxu0 0.0
    %982 = vmatprep.subr.mxu0 0.0
    %983 = vmatpush2.xpose.msra.mxu0 0.0
    %984 = vmatprep.subr.mxu0 0.0
    %985 = vmatpush2.xpose.msra.mxu0 0.0
    %986 = vmatprep.subr.mxu0 0.0
    %987 = vmatpush2.xpose.msra.mxu0 0.0
    %988 = vmatprep.subr.mxu0 0.0
    %989 = vmatpush2.xpose.msra.mxu0 0.0
    %990 = vmatprep.subr.mxu0 0.0
    %991 = vmatpush2.xpose.msra.mxu0 0.0
    %992 = vmatprep.subr.mxu0 0.0
    %993 = vmatpush2.xpose.msra.mxu0 0.0
    %994 = vmatprep.mubr.f32.mxu0 0.0
    %995 = vmatmul.mubr.f32.gmra.mxu0 %v922
    %v996 = vpop.f32.mrf.mxu0
    %v997 = vadd.f32 %v839, %v996
    %v998 = vpop.f32.mrf.mxu0
    %999 = vdwg.mxu0
    %vm1000 = vcmask 130048
    %v1001 = vsel %vm1000, %v918, -inf
    %1002 = vmax.xlane.f32.xlu0 %v1001
    %v1003 = vpop.xlane.xlu0 %1002
    %v1004 = vsel %vm1000, %v997, -inf
    %1005 = vmax.xlane.f32.xlu0 %v1004
    %v1006 = vpop.xlane.xlu0 %1005
    %v1007 = vsub.f32 %v918, %v1003
    %v1008 = vsub.f32 %v997, %v1006
    %v1009 = vmul.f32 %v1007, 1.442695
    %v1010 = vpow.pop %v1009
    %v1011 = vmul.f32 %v1008, 1.442695
    %v1012 = vpow.pop %v1011
    %v1013 = vsel %vm1000, %v1010, 0.0
    %1014 = vadd.xlane.f32.xlu0 %v1013
    %v1015 = vpop.xlane.xlu0 %1014
    %v1016 = vsel %vm1000, %v1012, 0.0
    %1017 = vadd.xlane.f32.xlu0 %v1016
    %v1018 = vpop.xlane.xlu0 %1017
    %v1019 = vrcp.pop %v1015
    %v1020 = vrcp.pop %v1018
    %v1021 = vmul.f32 %v1010, %v1019
    %v1022 = vmul.f32 %v1012, %v1020
    %1023 = vst.msk [vmem:[#allocation4] sm:$0xff] %vm1000, %v1021
    %1024 = vst.msk [vmem:[#allocation4 + $0x8] sm:$0xff] %vm1000, %v1022
    %v1026 = vsel %vm1000, %v1021, 0
    %1028 = vmatprep.subr.mxu0 0.0
    %1029 = vmatpush1.msra.mxu0 0.0
    %1030 = vmatprep.subr.mxu0 0.0
    %1031 = vmatpush1.msra.mxu0 0.0
    %1032 = vmatprep.subr.mxu0 0.0
    %1033 = vmatpush1.msra.mxu0 0.0
    %1034 = vmatprep.subr.mxu0 0.0
    %1035 = vmatpush1.msra.mxu0 0.0
    %1036 = vmatprep.subr.mxu0 0.0
    %1037 = vmatpush1.msra.mxu0 0.0
    %1038 = vmatprep.subr.mxu0 0.0
    %1039 = vmatpush1.msra.mxu0 0.0
    %1040 = vmatprep.subr.mxu0 0.0
    %1041 = vmatpush1.msra.mxu0 0.0
    %1042 = vmatprep.subr.mxu0 0.0
    %1043 = vmatpush1.msra.mxu0 0.0
    %1044 = vmatprep.subr.mxu0 0.0
    %1045 = vmatpush1.msra.mxu0 0.0
    %1046 = vmatprep.subr.mxu0 0.0
    %1047 = vmatpush1.msra.mxu0 0.0
    %1048 = vmatprep.subr.mxu0 0.0
    %1049 = vmatpush1.msra.mxu0 0.0
    %1050 = vmatprep.subr.mxu0 0.0
    %1051 = vmatpush1.msra.mxu0 0.0
    %1052 = vmatprep.subr.mxu0 0.0
    %1053 = vmatpush1.msra.mxu0 0.0
    %1054 = vmatprep.subr.mxu0 0.0
    %1055 = vmatpush1.msra.mxu0 0.0
    %1056 = vmatprep.subr.mxu0 0.0
    %1057 = vmatpush1.msra.mxu0 %v715
    %1058 = vmatprep.subr.mxu0 0.0
    %1059 = vmatpush1.msra.mxu0 %v713
    %1060 = vmatprep.subr.mxu0 0.0
    %1061 = vmatpush2.msra.mxu0 0.0
    %1062 = vmatprep.subr.mxu0 0.0
    %1063 = vmatpush2.msra.mxu0 0.0
    %1064 = vmatprep.subr.mxu0 0.0
    %1065 = vmatpush2.msra.mxu0 0.0
    %1066 = vmatprep.subr.mxu0 0.0
    %1067 = vmatpush2.msra.mxu0 0.0
    %1068 = vmatprep.subr.mxu0 0.0
    %1069 = vmatpush2.msra.mxu0 0.0
    %1070 = vmatprep.subr.mxu0 0.0
    %1071 = vmatpush2.msra.mxu0 0.0
    %1072 = vmatprep.subr.mxu0 0.0
    %1073 = vmatpush2.msra.mxu0 0.0
    %1074 = vmatprep.subr.mxu0 0.0
    %1075 = vmatpush2.msra.mxu0 0.0
    %1076 = vmatprep.subr.mxu0 0.0
    %1077 = vmatpush2.msra.mxu0 0.0
    %1078 = vmatprep.subr.mxu0 0.0
    %1079 = vmatpush2.msra.mxu0 0.0
    %1080 = vmatprep.subr.mxu0 0.0
    %1081 = vmatpush2.msra.mxu0 0.0
    %1082 = vmatprep.subr.mxu0 0.0
    %1083 = vmatpush2.msra.mxu0 0.0
    %1084 = vmatprep.subr.mxu0 0.0
    %1085 = vmatpush2.msra.mxu0 0.0
    %1086 = vmatprep.subr.mxu0 0.0
    %1087 = vmatpush2.msra.mxu0 0.0
    %1088 = vmatprep.subr.mxu0 0.0
    %1089 = vmatpush2.msra.mxu0 0.0
    %1090 = vmatprep.subr.mxu0 0.0
    %1091 = vmatpush2.msra.mxu0 0.0
    %1092 = vmatprep.mubr.f32.mxu0 0.0
    %1093 = vmatmul.mubr.f32.gmra.mxu0 %v1026
    %v1094 = vpop.f32.mrf.mxu0
    %v1095 = vadd.f32 0.0, %v1094
    %v1096 = vpop.f32.mrf.mxu0
    %1097 = vdwg.mxu0
    %v1099 = vsel %vm1000, %v1022, 0
    %1101 = vmatprep.subr.mxu0 0.0
    %1102 = vmatpush1.msra.mxu0 0.0
    %1103 = vmatprep.subr.mxu0 0.0
    %1104 = vmatpush1.msra.mxu0 0.0
    %1105 = vmatprep.subr.mxu0 0.0
    %1106 = vmatpush1.msra.mxu0 0.0
    %1107 = vmatprep.subr.mxu0 0.0
    %1108 = vmatpush1.msra.mxu0 0.0
    %1109 = vmatprep.subr.mxu0 0.0
    %1110 = vmatpush1.msra.mxu0 0.0
    %1111 = vmatprep.subr.mxu0 0.0
    %1112 = vmatpush1.msra.mxu0 0.0
    %1113 = vmatprep.subr.mxu0 0.0
    %1114 = vmatpush1.msra.mxu0 0.0
    %1115 = vmatprep.subr.mxu0 0.0
    %1116 = vmatpush1.msra.mxu0 0.0
    %1117 = vmatprep.subr.mxu0 0.0
    %1118 = vmatpush1.msra.mxu0 0.0
    %1119 = vmatprep.subr.mxu0 0.0
    %1120 = vmatpush1.msra.mxu0 0.0
    %1121 = vmatprep.subr.mxu0 0.0
    %1122 = vmatpush1.msra.mxu0 0.0
    %1123 = vmatprep.subr.mxu0 0.0
    %1124 = vmatpush1.msra.mxu0 0.0
    %1125 = vmatprep.subr.mxu0 0.0
    %1126 = vmatpush1.msra.mxu0 0.0
    %1127 = vmatprep.subr.mxu0 0.0
    %1128 = vmatpush1.msra.mxu0 0.0
    %1129 = vmatprep.subr.mxu0 0.0
    %1130 = vmatpush1.msra.mxu0 %v716
    %1131 = vmatprep.subr.mxu0 0.0
    %1132 = vmatpush1.msra.mxu0 %v714
    %1133 = vmatprep.subr.mxu0 0.0
    %1134 = vmatpush2.msra.mxu0 0.0
    %1135 = vmatprep.subr.mxu0 0.0
    %1136 = vmatpush2.msra.mxu0 0.0
    %1137 = vmatprep.subr.mxu0 0.0
    %1138 = vmatpush2.msra.mxu0 0.0
    %1139 = vmatprep.subr.mxu0 0.0
    %1140 = vmatpush2.msra.mxu0 0.0
    %1141 = vmatprep.subr.mxu0 0.0
    %1142 = vmatpush2.msra.mxu0 0.0
    %1143 = vmatprep.subr.mxu0 0.0
    %1144 = vmatpush2.msra.mxu0 0.0
    %1145 = vmatprep.subr.mxu0 0.0
    %1146 = vmatpush2.msra.mxu0 0.0
    %1147 = vmatprep.subr.mxu0 0.0
    %1148 = vmatpush2.msra.mxu0 0.0
    %1149 = vmatprep.subr.mxu0 0.0
    %1150 = vmatpush2.msra.mxu0 0.0
    %1151 = vmatprep.subr.mxu0 0.0
    %1152 = vmatpush2.msra.mxu0 0.0
    %1153 = vmatprep.subr.mxu0 0.0
    %1154 = vmatpush2.msra.mxu0 0.0
    %1155 = vmatprep.subr.mxu0 0.0
    %1156 = vmatpush2.msra.mxu0 0.0
    %1157 = vmatprep.subr.mxu0 0.0
    %1158 = vmatpush2.msra.mxu0 0.0
    %1159 = vmatprep.subr.mxu0 0.0
    %1160 = vmatpush2.msra.mxu0 0.0
    %1161 = vmatprep.subr.mxu0 0.0
    %1162 = vmatpush2.msra.mxu0 0.0
    %1163 = vmatprep.subr.mxu0 0.0
    %1164 = vmatpush2.msra.mxu0 0.0
    %1165 = vmatprep.mubr.f32.mxu0 0.0
    %1166 = vmatmul.mubr.f32.gmra.mxu0 %v1099
    %v1167 = vpop.f32.mrf.mxu0
    %v1168 = vadd.f32 0.0, %v1167
    %v1169 = vpop.f32.mrf.mxu0
    %1170 = vdwg.mxu0
    %1173 = vrot.lane.b32.xlu0 %v1095, 32
    %v1174 = vpop.permute.xlu0 %1173
    %1175 = vrot.lane.b32.xlu0 %v1168, 32
    %v1176 = vpop.permute.xlu0 %1175
    %v1179 = vsel %vm66, %v804, %v1174
    %v1180 = vsel %vm66, %v805, %v1176
    %v1181 = vld [vmem:[%s15] sm:$0xff]
    %v1182 = vld [vmem:[%s15 + $0x8] sm:$0xff]
    %v1183 = vld [vmem:[%s15 + $0x10] sm:$0xff]
    %v1184 = vld [vmem:[%s15 + $0x18] sm:$0xff]
    %v1185 = vld [vmem:[%s15 + $0x20] sm:$0xff]
    %v1186 = vld [vmem:[%s15 + $0x28] sm:$0xff]
    %v1187 = vld [vmem:[%s15 + $0x30] sm:$0xff]
    %v1188 = vld [vmem:[%s15 + $0x38] sm:$0xff]
    %v1190 = vsel %vm159, %v1179, 0
    %v1193 = vsel %vm159, %v1180, 0
    %1195 = vmatprep.subr.mxu0 0.0
    %1196 = vmatpush1.msra.mxu0 0.0
    %1197 = vmatprep.subr.mxu0 0.0
    %1198 = vmatpush1.msra.mxu0 0.0
    %1199 = vmatprep.subr.mxu0 0.0
    %1200 = vmatpush1.msra.mxu0 0.0
    %1201 = vmatprep.subr.mxu0 0.0
    %1202 = vmatpush1.msra.mxu0 0.0
    %1203 = vmatprep.subr.mxu0 0.0
    %1204 = vmatpush1.msra.mxu0 0.0
    %1205 = vmatprep.subr.mxu0 0.0
    %1206 = vmatpush1.msra.mxu0 0.0
    %1207 = vmatprep.subr.mxu0 0.0
    %1208 = vmatpush1.msra.mxu0 0.0
    %1209 = vmatprep.subr.mxu0 0.0
    %1210 = vmatpush1.msra.mxu0 0.0
    %1211 = vmatprep.subr.mxu0 0.0
    %1212 = vmatpush1.msra.mxu0 %v1188
    %1213 = vmatprep.subr.mxu0 0.0
    %1214 = vmatpush1.msra.mxu0 %v1187
    %1215 = vmatprep.subr.mxu0 0.0
    %1216 = vmatpush1.msra.mxu0 %v1186
    %1217 = vmatprep.subr.mxu0 0.0
    %1218 = vmatpush1.msra.mxu0 %v1185
    %1219 = vmatprep.subr.mxu0 0.0
    %1220 = vmatpush1.msra.mxu0 %v1184
    %1221 = vmatprep.subr.mxu0 0.0
    %1222 = vmatpush1.msra.mxu0 %v1183
    %1223 = vmatprep.subr.mxu0 0.0
    %1224 = vmatpush1.msra.mxu0 %v1182
    %1225 = vmatprep.subr.mxu0 0.0
    %1226 = vmatpush1.msra.mxu0 %v1181
    %1227 = vmatprep.subr.mxu0 0.0
    %1228 = vmatpush2.msra.mxu0 0.0
    %1229 = vmatprep.subr.mxu0 0.0
    %1230 = vmatpush2.msra.mxu0 0.0
    %1231 = vmatprep.subr.mxu0 0.0
    %1232 = vmatpush2.msra.mxu0 0.0
    %1233 = vmatprep.subr.mxu0 0.0
    %1234 = vmatpush2.msra.mxu0 0.0
    %1235 = vmatprep.subr.mxu0 0.0
    %1236 = vmatpush2.msra.mxu0 0.0
    %1237 = vmatprep.subr.mxu0 0.0
    %1238 = vmatpush2.msra.mxu0 0.0
    %1239 = vmatprep.subr.mxu0 0.0
    %1240 = vmatpush2.msra.mxu0 0.0
    %1241 = vmatprep.subr.mxu0 0.0
    %1242 = vmatpush2.msra.mxu0 0.0
    %1243 = vmatprep.subr.mxu0 0.0
    %1244 = vmatpush2.msra.mxu0 0.0
    %1245 = vmatprep.subr.mxu0 0.0
    %1246 = vmatpush2.msra.mxu0 0.0
    %1247 = vmatprep.subr.mxu0 0.0
    %1248 = vmatpush2.msra.mxu0 0.0
    %1249 = vmatprep.subr.mxu0 0.0
    %1250 = vmatpush2.msra.mxu0 0.0
    %1251 = vmatprep.subr.mxu0 0.0
    %1252 = vmatpush2.msra.mxu0 0.0
    %1253 = vmatprep.subr.mxu0 0.0
    %1254 = vmatpush2.msra.mxu0 0.0
    %1255 = vmatprep.subr.mxu0 0.0
    %1256 = vmatpush2.msra.mxu0 0.0
    %1257 = vmatprep.subr.mxu0 0.0
    %1258 = vmatpush2.msra.mxu0 0.0
    %1259 = vmatprep.mubr.f32.mxu0 0.0
    %1260 = vmatmul.mubr.f32.gmra.mxu0 %v1190
    %v1261 = vpop.f32.mrf.mxu0
    %v1262 = vadd.f32 0.0, %v1261
    %v1263 = vpop.f32.mrf.mxu0
    %1264 = vmatprep.mubr.f32.mxu0 0.0
    %1265 = vmatmul.mubr.f32.gmra.mxu0 %v1193
    %v1266 = vpop.f32.mrf.mxu0
    %v1267 = vadd.f32 0.0, %v1266
    %v1268 = vpop.f32.mrf.mxu0
    %1269 = vdwg.mxu0
    %v1270 = vtanh.pop %v1262
    %v1271 = vtanh.pop %v1267
    %1272 = vst.msk [vmem:[#allocation2] sm:$0xff] %vm66, %v1270
    %1273 = vst.msk [vmem:[#allocation2 + $0x8] sm:$0xff] %vm66, %v1271
    // Predicated region
    $region66: #{fused_forward.1} parent=1 // pred_check
      _
    $region67: #{fused_forward.1} parent=1 // pred_check_branch
      %1275 = sbr.rel (0) target = $region69
    $region68: #{fused_forward.1} parent=1 // pred_region
      %s1277 = ssub.s32 256, 256
      %1278 = vsyncadd [#allocation3], %s1277
      %s1279 = sshll.u32 [#allocation2], 4
      %s1280 = int_to_ptr.vmem [resolvable:$true] %s1279
      %1285 = dma.vmem_to_hbm [thread:$0]  %s1280, 256, %s16, [#allocation3], 128, 128, 8
    $region69: #{fused_forward.1} parent=1 // pred_fallthru
      _
    // Predicated region
    $region70: #{fused_forward.1} parent=1 // pred_check
      _
    $region71: #{fused_forward.1} parent=1 // pred_check_branch
      %1287 = sbr.rel (0) target = $region73
    $region72: #{fused_forward.1} parent=1 // pred_region
      %s1289 = ssub.s32 256, 256
      %1290 = vsyncadd [#allocation5], %s1289
      %s1291 = sshll.u32 [#allocation4], 4
      %s1292 = int_to_ptr.vmem [resolvable:$true] %s1291
      %1297 = dma.vmem_to_hbm [thread:$0]  %s1292, 256, %s17, [#allocation5], 128, 128, 8
    $region73: #{fused_forward.1} parent=1 // pred_fallthru
      _
    // Predicated region
    $region74: #{fused_forward.1} parent=1 // pred_check
      _
    $region75: #{fused_forward.1} parent=1 // pred_check_branch
      %1299 = sbr.rel (0) target = $region77
    $region76: #{fused_forward.1} parent=1 // pred_region
      %s1301 = ssub.s32 32, 32
      %1302 = vsyncadd [#allocation5], %s1301
      %s1304 = sshll.u32 [#allocation6], 4
      %s1305 = int_to_ptr.vmem [resolvable:$true] %s1304
      %1307 = dma.vmem_to_hbm [thread:$0]  %s1305, 32, %s18, [#allocation5]
    $region77: #{fused_forward.1} parent=1 // pred_fallthru
      _
    // Predicated region
    $region78: #{fused_forward.1} parent=1 // pred_check
      _
    $region79: #{fused_forward.1} parent=1 // pred_check_branch
      %1309 = sbr.rel (0) target = $region81
    $region80: #{fused_forward.1} parent=1 // pred_region
      %s1311 = ssub.s32 32, 32
      %1312 = vsyncadd [#allocation8], %s1311
      %s1314 = sshll.u32 [#allocation7], 4
      %s1315 = int_to_ptr.vmem [resolvable:$true] %s1314
      %1317 = dma.vmem_to_hbm [thread:$0]  %s1315, 32, %s19, [#allocation8]
    $region81: #{fused_forward.1} parent=1 // pred_fallthru
      _
    // Predicated region
    $region82: #{fused_forward.1} parent=1 // pred_check
      _
    $region83: #{fused_forward.1} parent=1 // pred_check_branch
      %1319 = sbr.rel (0) target = $region85
    $region84: #{fused_forward.1} parent=1 // pred_region
      %1320 = dma.done [#allocation3], 256
    $region85: #{fused_forward.1} parent=1 // pred_fallthru
      _
    // Predicated region
    $region86: #{fused_forward.1} parent=1 // pred_check
      _
    $region87: #{fused_forward.1} parent=1 // pred_check_branch
      %1322 = sbr.rel (0) target = $region89
    $region88: #{fused_forward.1} parent=1 // pred_region
      %1323 = dma.done [#allocation5], 256
    $region89: #{fused_forward.1} parent=1 // pred_fallthru
      _
    // Predicated region
    $region90: #{fused_forward.1} parent=1 // pred_check
      _
    $region91: #{fused_forward.1} parent=1 // pred_check_branch
      %1325 = sbr.rel (0) target = $region93
    $region92: #{fused_forward.1} parent=1 // pred_region
      %1326 = dma.done [#allocation5], 32
    $region93: #{fused_forward.1} parent=1 // pred_fallthru
      _
    // Predicated region
    $region94: #{fused_forward.1} parent=1 // pred_check
      _
    $region95: #{fused_forward.1} parent=1 // pred_check_branch
      %1328 = sbr.rel (0) target = $region97
    $region96: #{fused_forward.1} parent=1 // pred_region
      %1329 = dma.done [#allocation8], 32
    $region97: #{fused_forward.1} parent=1 // pred_fallthru
      _
    %1330 = vsyncpa [#allocation3], 1
    %1331 = vsyncpa [#allocation5], 1
    %1332 = vsyncpa [#allocation8], 1

</llo_original>
